<compile_context>
chip_gen: v7x
topology: tpu7x:2x2x1
jax: 0.10.0
libtpu: 0.0.40
codegen_flags: <defaults>
</compile_context>

<pallas_src>
import numpy as np
import jax
import jax.numpy as jnp
from jax.experimental import pallas as pl
from jax.experimental.pallas import tpu as pltpu

LEAKY_SLOPE = 0.01  # PyTorch nn.LeakyReLU default negative_slope


def padding_to_be_divisible_by_n(input_size: int, divisor: int) -> int:
    if input_size % divisor == 0:
        return 0
    return divisor - input_size % divisor


# ----------------------------- parameter setup ------------------------------

def conv1d_same_to_dense(w, L):
    """Conv1d weights (Cout, Cin, K), odd K, 'same' zero-pad, stride 1 ->
    dense matrix (Cout*L, Cin*L) so that y_flat = W_dense @ x_flat,
    flat index = channel * L + position (channel-major)."""
    Cout, Cin, K = w.shape
    pad = K // 2
    lo = jnp.arange(L)
    t = jnp.arange(K)
    li = lo[:, None] + t[None, :] - pad                      # (L, K)
    valid = (li >= 0) & (li < L)
    oh = (li[:, :, None] == jnp.arange(L)[None, None, :]) & valid[:, :, None]
    dense = jnp.einsum("oik,lkm->olim", w, oh.astype(w.dtype))  # (Cout,L,Cin,L)
    return dense.reshape(Cout * L, Cin * L)


def pool_permutation(Cout, L):
    """Row permutation so that MaxPool1d(2) over the length axis becomes
    max(first_half_rows, second_half_rows) on the flat representation, and the
    pooled result lands back in standard channel-major order."""
    idx = np.arange(Cout * L).reshape(Cout, L)
    return np.concatenate([idx[:, 0::2].reshape(-1), idx[:, 1::2].reshape(-1)])


def init_params(input_channels, num_poolings, key):
    divisor = 2 ** num_poolings
    padded = input_channels + padding_to_be_divisible_by_n(input_channels, divisor)

    # (Cin, Cout, K, L, pool_after) for each conv layer, mirroring __init__.
    plan = []
    L = padded
    cin = 1
    for i in range(num_poolings):
        cout = padded // (2 ** (i + 1))
        plan.append((cin, cout, 11, L, True))
        cin = cout
        L = L // 2
    plan.append((cin, padded // 2 ** (num_poolings + 1), 9, L, False))
    cin = padded // 2 ** (num_poolings + 1)
    plan.append((cin, 1, 7, L, False))

    layers, raw, pool_flags = [], [], []
    for li_idx, (ci, co, k, L_layer, pool) in enumerate(plan):
        key, k1, k2 = jax.random.split(key, 3)
        bound = 1.0 / np.sqrt(ci * k)   # PyTorch default Conv1d init bound
        w = jax.random.uniform(k1, (co, ci, k), jnp.float32, -bound, bound)
        b = jax.random.uniform(k2, (co,), jnp.float32, -bound, bound)
        # Quantize conv weights to bf16 once; kernel (bf16 MXU) and pure-JAX
        # reference (f32 convs) then share identical weight values.
        w = w.astype(jnp.bfloat16).astype(jnp.float32)
        Wd = conv1d_same_to_dense(w, L_layer)             # (co*L, ci*L)
        bd = jnp.repeat(b, L_layer)[:, None]              # (co*L, 1)
        if pool:
            perm = pool_permutation(co, L_layer)
            Wd = Wd[perm]
            bd = bd[perm]
        if li_idx == 0:
            # First layer has Cin == 1: the zero spectral padding of x only
            # ever multiplies columns >= input_channels, so drop them and feed
            # the kernel the unpadded (N, input_channels) input directly.
            Wd = Wd[:, :input_channels]
        layers.append((Wd.astype(jnp.bfloat16), bd.astype(jnp.float32)))
        raw.append((w, b, pool))
        pool_flags.append(pool)

    return {
        "padded_channels": padded,
        "layers": layers,          # bf16 dense (permuted) matrices + f32 bias
        "raw": raw,                # raw (quantized) conv weights for reference
        "pool_flags": tuple(pool_flags),
    }


# ------------------------------- Pallas kernel ------------------------------

def make_encoder_kernel(pool_flags):
    n = len(pool_flags)

    def kernel(x_ref, *refs):
        o_ref = refs[-1]
        xb = x_ref[...]                                   # (tile_n, C) bf16
        h = None
        for i in range(n):
            w = refs[2 * i][...]                          # (Cout*L, Cin*L) bf16
            b = refs[2 * i + 1][...]                      # (Cout*L, 1) f32
            if i == 0:
                # Contract x's channel axis: (M, K) x (tile_n, K) -> (M, tile_n)
                h = jax.lax.dot_general(
                    w, xb,
                    dimension_numbers=(((1,), (1,)), ((), ())),
                    preferred_element_type=jnp.float32)
            else:
                h = jnp.dot(w, h.astype(jnp.bfloat16),
                            preferred_element_type=jnp.float32)
            h = h + b                                      # f32 bias add (VPU)
            if i < n - 1:
                h = jnp.maximum(h, LEAKY_SLOPE * h)        # LeakyReLU (max+mul)
            else:
                # Sigmoid: exp on EUP, approx reciprocal also on EUP.
                h = pl.reciprocal(1.0 + jnp.exp(-h), approx=True)
            if pool_flags[i]:                              # MaxPool1d(2)
                half = h.shape[0] // 2
                h = jnp.maximum(h[:half, :], h[half:, :])
        o_ref[...] = h.astype(o_ref.dtype)

    return kernel


def conv1d_encoder_forward(x, params, num_poolings, tile_n=512):
    B, C, H, W = x.shape
    N = B * H * W
    padded = params["padded_channels"]

    # flatten_spacial_dims: (B, C, H, W) -> (B*H*W, C).  Spectral zero-padding
    # is folded into the truncated first-layer weight, so no host-side pad of
    # the channel axis and no host-side transpose of the big (N, C) matrix.
    xf = jnp.transpose(x, (0, 2, 3, 1)).reshape(N, C).astype(jnp.bfloat16)

    n_pad = (-N) % tile_n
    if n_pad:
        xf = jnp.pad(xf, ((0, n_pad), (0, 0)))
    n_tot = N + n_pad

    operands = [xf]
    in_specs = [pl.BlockSpec((tile_n, C), lambda i: (i, 0))]
    for (Wd, bd) in params["layers"]:
        operands.append(Wd)
        in_specs.append(pl.BlockSpec(Wd.shape, lambda i: (0, 0)))
        operands.append(bd)
        in_specs.append(pl.BlockSpec(bd.shape, lambda i: (0, 0)))

    L_out = padded // (2 ** num_poolings)

    # Advisory cost estimate for XLA's scheduler.
    flops = 2 * sum(int(Wd.shape[0]) * int(Wd.shape[1])
                    for Wd, _ in params["layers"]) * n_tot
    transcendentals = L_out * n_tot
    bytes_accessed = (xf.size * 2
                      + sum(Wd.size * 2 + bd.size * 4
                            for Wd, bd in params["layers"])
                      + L_out * n_tot * 4)

    out = pl.pallas_call(
        make_encoder_kernel(params["pool_flags"]),
        out_shape=jax.ShapeDtypeStruct((L_out, n_tot), jnp.float32),
        grid=(n_tot // tile_n,),
        in_specs=in_specs,
        out_specs=pl.BlockSpec((L_out, tile_n), lambda i: (0, i)),
        compiler_params=pltpu.CompilerParams(dimension_semantics=("parallel",)),
        cost_estimate=pl.CostEstimate(
            flops=int(flops),
            transcendentals=int(transcendentals),
            bytes_accessed=int(bytes_accessed)),
    )(*operands)

    # Back to the PyTorch output layout: (B*H*W, 1, L_out).  The [:, :N] slice
    # removes the lane-padding pixels (their junk sigmoid values are dropped).
    return out[:, :N].T.reshape(N, 1, L_out)


# ----------------------------- pure-JAX reference ----------------------------

def reference_forward(x, params, num_poolings):
    B, C, H, W = x.shape
    padded = params["padded_channels"]
    h = jnp.transpose(x, (0, 2, 3, 1)).reshape(B * H * W, 1, C)
    h = jnp.pad(h, ((0, 0), (0, 0), (0, padded - C)))
    n = len(params["raw"])
    for i, (w, b, pool) in enumerate(params["raw"]):
        h = jax.lax.conv_general_dilated(
            h, w, window_strides=(1,), padding="SAME",
            dimension_numbers=("NCH", "OIH", "NCH"))
        h = h + b[None, :, None]
        if i < n - 1:
            h = jnp.where(h > 0, h, LEAKY_SLOPE * h)
        else:
            h = jax.nn.sigmoid(h)
        if pool:
            h = jnp.maximum(h[:, :, 0::2], h[:, :, 1::2])
    return h


# ----------------------------------- main ------------------------------------

if __name__ == "__main__":
    input_channels = 14          # not divisible by 2**num_poolings -> exercises padding
    num_poolings = 2
    B, H, W = 2, 16, 32          # N = B*H*W = 1024 pixels -> grid of 2 tiles of 512

    key = jax.random.PRNGKey(0)
    k_x, k_p = jax.random.split(key)
    x = jax.random.normal(k_x, (B, input_channels, H, W), jnp.float32)

    params = init_params(input_channels, num_poolings, k_p)

    out = conv1d_encoder_forward(x, params, num_poolings)
    out = jax.block_until_ready(out)

    L_out = params["padded_channels"] // (2 ** num_poolings)
    assert out.shape == (B * H * W, 1, L_out), out.shape

    ref = jax.block_until_ready(reference_forward(x, params, num_poolings))
    # bf16 activations into the MXU (f32 accumulate) vs f32 reference convs.
    assert np.allclose(np.asarray(out), np.asarray(ref), atol=2e-2, rtol=2e-2), (
        float(np.max(np.abs(np.asarray(out) - np.asarray(ref)))))

    print("KERNEL_OK")
</pallas_src>

<mosaic_0001>
module attributes {stable_mosaic.version = 11 : i64} {
  func.func @kernel(%arg0: i32, %arg1: memref<512x14xbf16, #tpu.memory_space<vmem>>, %arg2: memref<128x14xbf16, #tpu.memory_space<vmem>>, %arg3: memref<128x1xf32, #tpu.memory_space<vmem>>, %arg4: memref<32x64xbf16, #tpu.memory_space<vmem>>, %arg5: memref<32x1xf32, #tpu.memory_space<vmem>>, %arg6: memref<8x16xbf16, #tpu.memory_space<vmem>>, %arg7: memref<8x1xf32, #tpu.memory_space<vmem>>, %arg8: memref<4x8xbf16, #tpu.memory_space<vmem>>, %arg9: memref<4x1xf32, #tpu.memory_space<vmem>>, %arg10: memref<4x512xf32, #tpu.memory_space<vmem>>) attributes {dimension_semantics = [#tpu.dimension_semantics<parallel>], iteration_bounds = array<i64: 2>, scalar_prefetch = 0 : i64, scratch_operands = 0 : i64, tpu.core_type = #tpu.core_type<tc>, window_params = [{transform_indices = @transform_0, window_bounds = array<i64: 512, 14>}, {pipeline_mode = #tpu.pipeline_mode<synchronous>, transform_indices = @transform_1, window_bounds = array<i64: 128, 14>}, {pipeline_mode = #tpu.pipeline_mode<synchronous>, transform_indices = @transform_2, window_bounds = array<i64: 128, 1>}, {pipeline_mode = #tpu.pipeline_mode<synchronous>, transform_indices = @transform_3, window_bounds = array<i64: 32, 64>}, {pipeline_mode = #tpu.pipeline_mode<synchronous>, transform_indices = @transform_4, window_bounds = array<i64: 32, 1>}, {pipeline_mode = #tpu.pipeline_mode<synchronous>, transform_indices = @transform_5, window_bounds = array<i64: 8, 16>}, {pipeline_mode = #tpu.pipeline_mode<synchronous>, transform_indices = @transform_6, window_bounds = array<i64: 8, 1>}, {pipeline_mode = #tpu.pipeline_mode<synchronous>, transform_indices = @transform_7, window_bounds = array<i64: 4, 8>}, {pipeline_mode = #tpu.pipeline_mode<synchronous>, transform_indices = @transform_8, window_bounds = array<i64: 4, 1>}, {transform_indices = @transform_9, window_bounds = array<i64: 4, 512>}]} {
    %c0 = arith.constant 0 : index
    %c0_0 = arith.constant 0 : index
    %0 = vector.load %arg1[%c0, %c0_0] : memref<512x14xbf16, #tpu.memory_space<vmem>>, vector<512x14xbf16>
    %c0_1 = arith.constant 0 : index
    %c0_2 = arith.constant 0 : index
    %1 = vector.load %arg2[%c0_1, %c0_2] : memref<128x14xbf16, #tpu.memory_space<vmem>>, vector<128x14xbf16>
    %c0_3 = arith.constant 0 : index
    %c0_4 = arith.constant 0 : index
    %2 = vector.load %arg3[%c0_3, %c0_4] : memref<128x1xf32, #tpu.memory_space<vmem>>, vector<128x1xf32>
    %cst = arith.constant dense<0.000000e+00> : vector<128x512xf32>
    %3 = tpu.matmul %1, %0, %cst {dimension_numbers = #tpu.dot_dimension_numbers<[1], [1], [0], [0], [0, 0, 1, 0], [], []>} : vector<128x14xbf16>, vector<512x14xbf16>, vector<128x512xf32> -> vector<128x512xf32>
    %4 = vector.broadcast %2 : vector<128x1xf32> to vector<128x512xf32>
    %5 = arith.addf %3, %4 : vector<128x512xf32>
    %cst_5 = arith.constant 0.00999999977 : f32
    %6 = vector.broadcast %cst_5 : f32 to vector<128x512xf32>
    %7 = arith.mulf %6, %5 : vector<128x512xf32>
    %8 = arith.maximumf %5, %7 : vector<128x512xf32>
    %9 = vector.extract_strided_slice %8 {offsets = [0, 0], sizes = [64, 512], strides = [1, 1]} : vector<128x512xf32> to vector<64x512xf32>
    %10 = vector.extract_strided_slice %8 {offsets = [64, 0], sizes = [64, 512], strides = [1, 1]} : vector<128x512xf32> to vector<64x512xf32>
    %11 = arith.maximumf %9, %10 : vector<64x512xf32>
    %c0_6 = arith.constant 0 : index
    %c0_7 = arith.constant 0 : index
    %12 = vector.load %arg4[%c0_6, %c0_7] : memref<32x64xbf16, #tpu.memory_space<vmem>>, vector<32x64xbf16>
    %c0_8 = arith.constant 0 : index
    %c0_9 = arith.constant 0 : index
    %13 = vector.load %arg5[%c0_8, %c0_9] : memref<32x1xf32, #tpu.memory_space<vmem>>, vector<32x1xf32>
    %14 = arith.truncf %11 : vector<64x512xf32> to vector<64x512xbf16>
    %cst_10 = arith.constant dense<0.000000e+00> : vector<32x512xf32>
    %15 = tpu.matmul %12, %14, %cst_10 {dimension_numbers = #tpu.dot_dimension_numbers<[1], [0], [0], [1], [0, 0, 1, 1], [], []>} : vector<32x64xbf16>, vector<64x512xbf16>, vector<32x512xf32> -> vector<32x512xf32>
    %16 = vector.broadcast %13 : vector<32x1xf32> to vector<32x512xf32>
    %17 = arith.addf %15, %16 : vector<32x512xf32>
    %cst_11 = arith.constant 0.00999999977 : f32
    %18 = vector.broadcast %cst_11 : f32 to vector<32x512xf32>
    %19 = arith.mulf %18, %17 : vector<32x512xf32>
    %20 = arith.maximumf %17, %19 : vector<32x512xf32>
    %21 = vector.extract_strided_slice %20 {offsets = [0, 0], sizes = [16, 512], strides = [1, 1]} : vector<32x512xf32> to vector<16x512xf32>
    %22 = vector.extract_strided_slice %20 {offsets = [16, 0], sizes = [16, 512], strides = [1, 1]} : vector<32x512xf32> to vector<16x512xf32>
    %23 = arith.maximumf %21, %22 : vector<16x512xf32>
    %c0_12 = arith.constant 0 : index
    %c0_13 = arith.constant 0 : index
    %24 = vector.load %arg6[%c0_12, %c0_13] : memref<8x16xbf16, #tpu.memory_space<vmem>>, vector<8x16xbf16>
    %c0_14 = arith.constant 0 : index
    %c0_15 = arith.constant 0 : index
    %25 = vector.load %arg7[%c0_14, %c0_15] : memref<8x1xf32, #tpu.memory_space<vmem>>, vector<8x1xf32>
    %26 = arith.truncf %23 : vector<16x512xf32> to vector<16x512xbf16>
    %cst_16 = arith.constant dense<0.000000e+00> : vector<8x512xf32>
    %27 = tpu.matmul %24, %26, %cst_16 {dimension_numbers = #tpu.dot_dimension_numbers<[1], [0], [0], [1], [0, 0, 1, 1], [], []>} : vector<8x16xbf16>, vector<16x512xbf16>, vector<8x512xf32> -> vector<8x512xf32>
    %28 = vector.broadcast %25 : vector<8x1xf32> to vector<8x512xf32>
    %29 = arith.addf %27, %28 : vector<8x512xf32>
    %cst_17 = arith.constant 0.00999999977 : f32
    %30 = vector.broadcast %cst_17 : f32 to vector<8x512xf32>
    %31 = arith.mulf %30, %29 : vector<8x512xf32>
    %32 = arith.maximumf %29, %31 : vector<8x512xf32>
    %c0_18 = arith.constant 0 : index
    %c0_19 = arith.constant 0 : index
    %33 = vector.load %arg8[%c0_18, %c0_19] : memref<4x8xbf16, #tpu.memory_space<vmem>>, vector<4x8xbf16>
    %c0_20 = arith.constant 0 : index
    %c0_21 = arith.constant 0 : index
    %34 = vector.load %arg9[%c0_20, %c0_21] : memref<4x1xf32, #tpu.memory_space<vmem>>, vector<4x1xf32>
    %35 = arith.truncf %32 : vector<8x512xf32> to vector<8x512xbf16>
    %cst_22 = arith.constant dense<0.000000e+00> : vector<4x512xf32>
    %36 = tpu.matmul %33, %35, %cst_22 {dimension_numbers = #tpu.dot_dimension_numbers<[1], [0], [0], [1], [0, 0, 1, 1], [], []>} : vector<4x8xbf16>, vector<8x512xbf16>, vector<4x512xf32> -> vector<4x512xf32>
    %37 = vector.broadcast %34 : vector<4x1xf32> to vector<4x512xf32>
    %38 = arith.addf %36, %37 : vector<4x512xf32>
    %cst_23 = arith.constant 0.000000e+00 : f32
    %39 = vector.broadcast %cst_23 : f32 to vector<4x512xf32>
    %40 = arith.subf %39, %38 : vector<4x512xf32>
    %41 = math.exp %40 : vector<4x512xf32>
    %cst_24 = arith.constant 1.000000e+00 : f32
    %42 = vector.broadcast %cst_24 : f32 to vector<4x512xf32>
    %43 = arith.addf %42, %41 : vector<4x512xf32>
    %44 = tpu.reciprocal %43 {approx = true} : vector<4x512xf32> -> vector<4x512xf32>
    %c0_25 = arith.constant 0 : index
    %c0_26 = arith.constant 0 : index
    %45 = vector.load %arg10[%c0_25, %c0_26] : memref<4x512xf32, #tpu.memory_space<vmem>>, vector<4x512xf32>
    tpu.vector_store %arg10[%c0_25, %c0_26], %44 {strides = array<i32>} : memref<4x512xf32, #tpu.memory_space<vmem>>, vector<4x512xf32>,
    return
  }
  func.func @transform_0(%arg0: i32) -> (i32, i32) {
    %c0_i32 = arith.constant 0 : i32
    %c0_i32_0 = arith.constant 0 : i32
    return %arg0, %c0_i32 : i32, i32
  }
  func.func @transform_1(%arg0: i32) -> (i32, i32) {
    %c0_i32 = arith.constant 0 : i32
    %c0_i32_0 = arith.constant 0 : i32
    %c0_i32_1 = arith.constant 0 : i32
    return %c0_i32, %c0_i32_0 : i32, i32
  }
  func.func @transform_2(%arg0: i32) -> (i32, i32) {
    %c0_i32 = arith.constant 0 : i32
    %c0_i32_0 = arith.constant 0 : i32
    %c0_i32_1 = arith.constant 0 : i32
    return %c0_i32, %c0_i32_0 : i32, i32
  }
  func.func @transform_3(%arg0: i32) -> (i32, i32) {
    %c0_i32 = arith.constant 0 : i32
    %c0_i32_0 = arith.constant 0 : i32
    %c0_i32_1 = arith.constant 0 : i32
    return %c0_i32, %c0_i32_0 : i32, i32
  }
  func.func @transform_4(%arg0: i32) -> (i32, i32) {
    %c0_i32 = arith.constant 0 : i32
    %c0_i32_0 = arith.constant 0 : i32
    %c0_i32_1 = arith.constant 0 : i32
    return %c0_i32, %c0_i32_0 : i32, i32
  }
  func.func @transform_5(%arg0: i32) -> (i32, i32) {
    %c0_i32 = arith.constant 0 : i32
    %c0_i32_0 = arith.constant 0 : i32
    %c0_i32_1 = arith.constant 0 : i32
    return %c0_i32, %c0_i32_0 : i32, i32
  }
  func.func @transform_6(%arg0: i32) -> (i32, i32) {
    %c0_i32 = arith.constant 0 : i32
    %c0_i32_0 = arith.constant 0 : i32
    %c0_i32_1 = arith.constant 0 : i32
    return %c0_i32, %c0_i32_0 : i32, i32
  }
  func.func @transform_7(%arg0: i32) -> (i32, i32) {
    %c0_i32 = arith.constant 0 : i32
    %c0_i32_0 = arith.constant 0 : i32
    %c0_i32_1 = arith.constant 0 : i32
    return %c0_i32, %c0_i32_0 : i32, i32
  }
  func.func @transform_8(%arg0: i32) -> (i32, i32) {
    %c0_i32 = arith.constant 0 : i32
    %c0_i32_0 = arith.constant 0 : i32
    %c0_i32_1 = arith.constant 0 : i32
    return %c0_i32, %c0_i32_0 : i32, i32
  }
  func.func @transform_9(%arg0: i32) -> (i32, i32) {
    %c0_i32 = arith.constant 0 : i32
    %c0_i32_0 = arith.constant 0 : i32
    return %c0_i32, %arg0 : i32, i32
  }
}

</mosaic_0001>

<llo_original>
// kernel: tpu_custom_call.1
$region0: #{tpu_custom_call.1}
  #allocation0 [shape = 'u32[]', space=smem, size = 0x4, offset = 0x4, fixed_abs, tag = 'smem constant byte address 0x4 - core index']
  #allocation1 [shape = 'u32[144,128]{1,0:T(1,128)}', space=vmem, size = 0x12000, scoped, tag = 'internal scratch']
  %s0 = inlined_call_operand.vmem [shape: bf16[1024,14], index: 0, kind: input, shape index: {}]
  %s1 = inlined_call_operand.vmem [shape: bf16[128,14], index: 1, kind: input, shape index: {}]
  %s2 = inlined_call_operand.vmem [shape: f32[128,1], index: 2, kind: input, shape index: {}]
  %s3 = inlined_call_operand.vmem [shape: bf16[32,64], index: 3, kind: input, shape index: {}]
  %s4 = inlined_call_operand.vmem [shape: f32[32,1], index: 4, kind: input, shape index: {}]
  %s5 = inlined_call_operand.vmem [shape: bf16[8,16], index: 5, kind: input, shape index: {}]
  %s6 = inlined_call_operand.vmem [shape: f32[8,1], index: 6, kind: input, shape index: {}]
  %s7 = inlined_call_operand.vmem [shape: bf16[4,8], index: 7, kind: input, shape index: {}]
  %s8 = inlined_call_operand.vmem [shape: f32[4,1], index: 8, kind: input, shape index: {}]
  %s9 = inlined_call_operand.hbm [shape: f32[4,1024], index: 9, kind: output, shape index: {}]
  %s10 = sld [smem:[#allocation0]]
  $region69: #{tpu_custom_call.1} parent=0
    _
  %s12 = ssub.s32 1, %s10
  %s13 = scalar_select 0, %s12, %s10
  $region1: #{tpu_custom_call.1} parent=0
    #allocation2 [shape = 'u8[16384]{0}', space=vmem, size = 0x4000, scoped, tag = 'output window, operand 0']
    #allocation3 [shape = 's32[2]{0}', space=sflag, size = 0x8, scoped, tag = 'scoped memory for tpu_custom_call.1']
    %14 = vsyncpa [#allocation3], 0
    %s15 = scalar_lea.sflag [#allocation3], 1
    %16 = vsyncpa %s15, 0
    loop: start=0, step=1, limit=4
    $region2: #{tpu_custom_call.1} parent=1 // loop_pre_header
      _
    $region3: #{tpu_custom_call.1} parent=1 // loop_header
      %s18 = sphi 0, %s22
      %p19 = scmp.ge.s32.totalorder %s18, 4
      %s28 = sphi 0, %s30
      %s31 = sphi 0, %s28
      %s32 = sphi 0, %s31
      %s48 = sphi 0, %s32
      %s52 = sphi 0, %s52
      %s54 = sphi 0, %s52
      %s55 = sphi 0, %s54
      %s69 = sphi 0, %s55
      %s73 = sphi 0, %s73
      %s75 = sphi 0, %s73
      %s76 = sphi 0, %s75
      %s90 = sphi 0, %s76
      %s94 = sphi 0, %s94
      %s96 = sphi 0, %s94
      %s97 = sphi 0, %s96
      %s111 = sphi 0, %s97
      %s115 = sphi 0, %s115
      %s117 = sphi 0, %s115
      %s118 = sphi 0, %s117
      %s132 = sphi 0, %s118
      %s136 = sphi 0, %s136
      %s138 = sphi 0, %s136
      %s139 = sphi 0, %s138
      %s153 = sphi 0, %s139
      %s157 = sphi 0, %s157
      %s159 = sphi 0, %s157
      %s160 = sphi 0, %s159
      %s174 = sphi 0, %s160
      %s178 = sphi 0, %s178
      %s180 = sphi 0, %s178
      %s181 = sphi 0, %s180
      %s195 = sphi 0, %s181
      %s199 = sphi 0, %s199
      %s201 = sphi 0, %s199
      %s202 = sphi 0, %s201
      %s216 = sphi 0, %s202
      %s222 = sphi 0, %s224
      %s225 = sphi 0, %s222
      %s226 = sphi 0, %s225
      %s242 = sphi 0, %s226
    $region4: #{tpu_custom_call.1} parent=1 // loop_header_branch
      %21 = sbr.rel (%p19) target = $region8
    $region5: #{tpu_custom_call.1} parent=1 // loop_body
      %s23 = ssub.s32 %s18, 1
      %s24 = ssub.s32 %s18, 2
      %s25 = sadd.s32 %s18, 1
      %s26 = ssub.s32 %s18, %s25
      %p27 = scmp.eq.s32.totalorder %s26, 0
      %s29 = sadd.s32 %s28, 1
      %s30 = scalar_select %p27, %s28, %s29
      %p33 = pneg %p27
      %p34 = scmp.eq.s32.totalorder %s18, 1
      %p35 = por %p33, %p34
      %p36 = scmp.ne.s32.totalorder %s28, %s31
      %p37 = scmp.eq.s32.totalorder %s18, 0
      %p38 = por %p36, %p37
      %p39 = scmp.ne.s32.totalorder %s28, %s31
      %p40 = scmp.eq.s32.totalorder %s23, 1
      %p41 = por %p39, %p40
      %p42 = scmp.ne.s32.totalorder %s31, %s32
      %p43 = scmp.eq.s32.totalorder %s23, 0
      %p44 = por %p42, %p43
      %p45 = scmp.ne.s32.totalorder %s31, %s32
      %p46 = scmp.eq.s32.totalorder %s24, 1
      %p47 = por %p45, %p46
      %p49 = scmp.ne.s32.totalorder %s32, %s48
      %p50 = scmp.eq.s32.totalorder %s24, 0
      %p51 = por %p49, %p50
      %s53 = sadd.s32 %s52, 1
      %p56 = scmp.eq.s32.totalorder %s18, 1
      %p57 = scmp.ne.s32.totalorder %s52, %s54
      %p58 = scmp.eq.s32.totalorder %s18, 0
      %p59 = por %p57, %p58
      %p60 = scmp.ne.s32.totalorder %s52, %s54
      %p61 = scmp.eq.s32.totalorder %s23, 1
      %p62 = por %p60, %p61
      %p63 = scmp.ne.s32.totalorder %s54, %s55
      %p64 = scmp.eq.s32.totalorder %s23, 0
      %p65 = por %p63, %p64
      %p66 = scmp.ne.s32.totalorder %s54, %s55
      %p67 = scmp.eq.s32.totalorder %s24, 1
      %p68 = por %p66, %p67
      %p70 = scmp.ne.s32.totalorder %s55, %s69
      %p71 = scmp.eq.s32.totalorder %s24, 0
      %p72 = por %p70, %p71
      %s74 = sadd.s32 %s73, 1
      %p77 = scmp.eq.s32.totalorder %s18, 1
      %p78 = scmp.ne.s32.totalorder %s73, %s75
      %p79 = scmp.eq.s32.totalorder %s18, 0
      %p80 = por %p78, %p79
      %p81 = scmp.ne.s32.totalorder %s73, %s75
      %p82 = scmp.eq.s32.totalorder %s23, 1
      %p83 = por %p81, %p82
      %p84 = scmp.ne.s32.totalorder %s75, %s76
      %p85 = scmp.eq.s32.totalorder %s23, 0
      %p86 = por %p84, %p85
      %p87 = scmp.ne.s32.totalorder %s75, %s76
      %p88 = scmp.eq.s32.totalorder %s24, 1
      %p89 = por %p87, %p88
      %p91 = scmp.ne.s32.totalorder %s76, %s90
      %p92 = scmp.eq.s32.totalorder %s24, 0
      %p93 = por %p91, %p92
      %s95 = sadd.s32 %s94, 1
      %p98 = scmp.eq.s32.totalorder %s18, 1
      %p99 = scmp.ne.s32.totalorder %s94, %s96
      %p100 = scmp.eq.s32.totalorder %s18, 0
      %p101 = por %p99, %p100
      %p102 = scmp.ne.s32.totalorder %s94, %s96
      %p103 = scmp.eq.s32.totalorder %s23, 1
      %p104 = por %p102, %p103
      %p105 = scmp.ne.s32.totalorder %s96, %s97
      %p106 = scmp.eq.s32.totalorder %s23, 0
      %p107 = por %p105, %p106
      %p108 = scmp.ne.s32.totalorder %s96, %s97
      %p109 = scmp.eq.s32.totalorder %s24, 1
      %p110 = por %p108, %p109
      %p112 = scmp.ne.s32.totalorder %s97, %s111
      %p113 = scmp.eq.s32.totalorder %s24, 0
      %p114 = por %p112, %p113
      %s116 = sadd.s32 %s115, 1
      %p119 = scmp.eq.s32.totalorder %s18, 1
      %p120 = scmp.ne.s32.totalorder %s115, %s117
      %p121 = scmp.eq.s32.totalorder %s18, 0
      %p122 = por %p120, %p121
      %p123 = scmp.ne.s32.totalorder %s115, %s117
      %p124 = scmp.eq.s32.totalorder %s23, 1
      %p125 = por %p123, %p124
      %p126 = scmp.ne.s32.totalorder %s117, %s118
      %p127 = scmp.eq.s32.totalorder %s23, 0
      %p128 = por %p126, %p127
      %p129 = scmp.ne.s32.totalorder %s117, %s118
      %p130 = scmp.eq.s32.totalorder %s24, 1
      %p131 = por %p129, %p130
      %p133 = scmp.ne.s32.totalorder %s118, %s132
      %p134 = scmp.eq.s32.totalorder %s24, 0
      %p135 = por %p133, %p134
      %s137 = sadd.s32 %s136, 1
      %p140 = scmp.eq.s32.totalorder %s18, 1
      %p141 = scmp.ne.s32.totalorder %s136, %s138
      %p142 = scmp.eq.s32.totalorder %s18, 0
      %p143 = por %p141, %p142
      %p144 = scmp.ne.s32.totalorder %s136, %s138
      %p145 = scmp.eq.s32.totalorder %s23, 1
      %p146 = por %p144, %p145
      %p147 = scmp.ne.s32.totalorder %s138, %s139
      %p148 = scmp.eq.s32.totalorder %s23, 0
      %p149 = por %p147, %p148
      %p150 = scmp.ne.s32.totalorder %s138, %s139
      %p151 = scmp.eq.s32.totalorder %s24, 1
      %p152 = por %p150, %p151
      %p154 = scmp.ne.s32.totalorder %s139, %s153
      %p155 = scmp.eq.s32.totalorder %s24, 0
      %p156 = por %p154, %p155
      %s158 = sadd.s32 %s157, 1
      %p161 = scmp.eq.s32.totalorder %s18, 1
      %p162 = scmp.ne.s32.totalorder %s157, %s159
      %p163 = scmp.eq.s32.totalorder %s18, 0
      %p164 = por %p162, %p163
      %p165 = scmp.ne.s32.totalorder %s157, %s159
      %p166 = scmp.eq.s32.totalorder %s23, 1
      %p167 = por %p165, %p166
      %p168 = scmp.ne.s32.totalorder %s159, %s160
      %p169 = scmp.eq.s32.totalorder %s23, 0
      %p170 = por %p168, %p169
      %p171 = scmp.ne.s32.totalorder %s159, %s160
      %p172 = scmp.eq.s32.totalorder %s24, 1
      %p173 = por %p171, %p172
      %p175 = scmp.ne.s32.totalorder %s160, %s174
      %p176 = scmp.eq.s32.totalorder %s24, 0
      %p177 = por %p175, %p176
      %s179 = sadd.s32 %s178, 1
      %p182 = scmp.eq.s32.totalorder %s18, 1
      %p183 = scmp.ne.s32.totalorder %s178, %s180
      %p184 = scmp.eq.s32.totalorder %s18, 0
      %p185 = por %p183, %p184
      %p186 = scmp.ne.s32.totalorder %s178, %s180
      %p187 = scmp.eq.s32.totalorder %s23, 1
      %p188 = por %p186, %p187
      %p189 = scmp.ne.s32.totalorder %s180, %s181
      %p190 = scmp.eq.s32.totalorder %s23, 0
      %p191 = por %p189, %p190
      %p192 = scmp.ne.s32.totalorder %s180, %s181
      %p193 = scmp.eq.s32.totalorder %s24, 1
      %p194 = por %p192, %p193
      %p196 = scmp.ne.s32.totalorder %s181, %s195
      %p197 = scmp.eq.s32.totalorder %s24, 0
      %p198 = por %p196, %p197
      %s200 = sadd.s32 %s199, 1
      %p203 = scmp.eq.s32.totalorder %s18, 1
      %p204 = scmp.ne.s32.totalorder %s199, %s201
      %p205 = scmp.eq.s32.totalorder %s18, 0
      %p206 = por %p204, %p205
      %p207 = scmp.ne.s32.totalorder %s199, %s201
      %p208 = scmp.eq.s32.totalorder %s23, 1
      %p209 = por %p207, %p208
      %p210 = scmp.ne.s32.totalorder %s201, %s202
      %p211 = scmp.eq.s32.totalorder %s23, 0
      %p212 = por %p210, %p211
      %p213 = scmp.ne.s32.totalorder %s201, %s202
      %p214 = scmp.eq.s32.totalorder %s24, 1
      %p215 = por %p213, %p214
      %p217 = scmp.ne.s32.totalorder %s202, %s216
      %p218 = scmp.eq.s32.totalorder %s24, 0
      %p219 = por %p217, %p218
      %s220 = ssub.s32 %s18, %s25
      %p221 = scmp.eq.s32.totalorder %s220, 0
      %s223 = sadd.s32 %s222, 1
      %s224 = scalar_select %p221, %s222, %s223
      %p227 = pneg %p221
      %p228 = scmp.eq.s32.totalorder %s18, 1
      %p229 = por %p227, %p228
      %p230 = scmp.ne.s32.totalorder %s222, %s225
      %p231 = scmp.eq.s32.totalorder %s18, 0
      %p232 = por %p230, %p231
      %p233 = scmp.ne.s32.totalorder %s222, %s225
      %p234 = scmp.eq.s32.totalorder %s23, 1
      %p235 = por %p233, %p234
      %p236 = scmp.ne.s32.totalorder %s225, %s226
      %p237 = scmp.eq.s32.totalorder %s23, 0
      %p238 = por %p236, %p237
      %p239 = scmp.ne.s32.totalorder %s225, %s226
      %p240 = scmp.eq.s32.totalorder %s24, 1
      %p241 = por %p239, %p240
      %p243 = scmp.ne.s32.totalorder %s226, %s242
      %p244 = scmp.eq.s32.totalorder %s24, 0
      %p245 = por %p243, %p244
      %p246 = scmp.le.s32.totalorder 1, %s18
      %p247 = scmp.lt.s32.totalorder %s18, 3
      %p248 = pnand %p246, %p247
      %p249 = pneg %p248
      // Predicated region
      $region9: #{tpu_custom_call.1} parent=5 // pred_check
        _
      $region10: #{tpu_custom_call.1} parent=5 // pred_check_branch
        %251 = sbr.rel (%p248) target = $region12
      $region11: #{tpu_custom_call.1} parent=5 // pred_region
        %s252 = ssub.s32 %s18, 1
        // Predicated region
        $region13: #{tpu_custom_call.1} parent=11 // pred_check
          %p253 = pneg %p65
        $region14: #{tpu_custom_call.1} parent=11 // pred_check_branch
          %255 = sbr.rel (%p253) target = $region16
        $region15: #{tpu_custom_call.1} parent=11 // pred_region
          _
        $region16: #{tpu_custom_call.1} parent=11 // pred_fallthru
          _
        // Predicated region
        $region17: #{tpu_custom_call.1} parent=11 // pred_check
          %p256 = pneg %p86
        $region18: #{tpu_custom_call.1} parent=11 // pred_check_branch
          %258 = sbr.rel (%p256) target = $region20
        $region19: #{tpu_custom_call.1} parent=11 // pred_region
          _
        $region20: #{tpu_custom_call.1} parent=11 // pred_fallthru
          _
        // Predicated region
        $region21: #{tpu_custom_call.1} parent=11 // pred_check
          %p259 = pneg %p107
        $region22: #{tpu_custom_call.1} parent=11 // pred_check_branch
          %261 = sbr.rel (%p259) target = $region24
        $region23: #{tpu_custom_call.1} parent=11 // pred_region
          _
        $region24: #{tpu_custom_call.1} parent=11 // pred_fallthru
          _
        // Predicated region
        $region25: #{tpu_custom_call.1} parent=11 // pred_check
          %p262 = pneg %p128
        $region26: #{tpu_custom_call.1} parent=11 // pred_check_branch
          %264 = sbr.rel (%p262) target = $region28
        $region27: #{tpu_custom_call.1} parent=11 // pred_region
          _
        $region28: #{tpu_custom_call.1} parent=11 // pred_fallthru
          _
        // Predicated region
        $region29: #{tpu_custom_call.1} parent=11 // pred_check
          %p265 = pneg %p149
        $region30: #{tpu_custom_call.1} parent=11 // pred_check_branch
          %267 = sbr.rel (%p265) target = $region32
        $region31: #{tpu_custom_call.1} parent=11 // pred_region
          _
        $region32: #{tpu_custom_call.1} parent=11 // pred_fallthru
          _
        // Predicated region
        $region33: #{tpu_custom_call.1} parent=11 // pred_check
          %p268 = pneg %p170
        $region34: #{tpu_custom_call.1} parent=11 // pred_check_branch
          %270 = sbr.rel (%p268) target = $region36
        $region35: #{tpu_custom_call.1} parent=11 // pred_region
          _
        $region36: #{tpu_custom_call.1} parent=11 // pred_fallthru
          _
        // Predicated region
        $region37: #{tpu_custom_call.1} parent=11 // pred_check
          %p271 = pneg %p191
        $region38: #{tpu_custom_call.1} parent=11 // pred_check_branch
          %273 = sbr.rel (%p271) target = $region40
        $region39: #{tpu_custom_call.1} parent=11 // pred_region
          _
        $region40: #{tpu_custom_call.1} parent=11 // pred_fallthru
          _
        // Predicated region
        $region41: #{tpu_custom_call.1} parent=11 // pred_check
          %p274 = pneg %p212
        $region42: #{tpu_custom_call.1} parent=11 // pred_check_branch
          %276 = sbr.rel (%p274) target = $region44
        $region43: #{tpu_custom_call.1} parent=11 // pred_region
          _
        $region44: #{tpu_custom_call.1} parent=11 // pred_fallthru
          _
      $region12: #{tpu_custom_call.1} parent=5 // pred_fallthru
        _
      %p277 = scmp.lt.s32.totalorder %s18, 2
      // Predicated region
      $region45: #{tpu_custom_call.1} parent=5 // pred_check
        %p278 = pneg %p277
      $region46: #{tpu_custom_call.1} parent=5 // pred_check_branch
        %280 = sbr.rel (%p278) target = $region48
      $region47: #{tpu_custom_call.1} parent=5 // pred_region
        // Predicated region
        $region49: #{tpu_custom_call.1} parent=47 // pred_check
          %p281 = pneg %p38
        $region50: #{tpu_custom_call.1} parent=47 // pred_check_branch
          %283 = sbr.rel (%p281) target = $region52
        $region51: #{tpu_custom_call.1} parent=47 // pred_region
          %s284 = smul.u32 64, %s18
          %p285 = scmp.lt.s32.totalorder %s284, 127
          %s286 = scalar_select %p285, %s284, 127
          %s287 = smul.addr %s286, 4
          %s288 = scalar_lea.vmem %s0, %s287
          %s289 = smul.u32 64, %s18
        $region52: #{tpu_custom_call.1} parent=47 // pred_fallthru
          _
      $region48: #{tpu_custom_call.1} parent=5 // pred_fallthru
        _
      %p290 = scmp.le.s32.totalorder 1, %s18
      %p291 = scmp.lt.s32.totalorder %s18, 3
      %p292 = pnand %p290, %p291
      %p293 = pneg %p292
      // Predicated region
      $region53: #{tpu_custom_call.1} parent=5 // pred_check
        _
      $region54: #{tpu_custom_call.1} parent=5 // pred_check_branch
        %295 = sbr.rel (%p292) target = $region56
      $region55: #{tpu_custom_call.1} parent=5 // pred_region
        %s296 = ssub.s32 %s18, 1
        %s297 = smul.u32 64, %s23
        %p298 = scmp.lt.s32.totalorder %s297, 127
        %s299 = scalar_select %p298, %s297, 127
        %s300 = smul.addr %s299, 4
        %s301 = scalar_lea.vmem %s0, %s300
        %p302 = pneg %p44
        %p303 = pneg %p41
        %p304 = pneg %p65
        %p305 = pneg %p62
        %p306 = pneg %p86
        %p307 = pneg %p83
        %p308 = pneg %p107
        %p309 = pneg %p104
        %p310 = pneg %p128
        %p311 = pneg %p125
        %p312 = pneg %p149
        %p313 = pneg %p146
        %p314 = pneg %p170
        %p315 = pneg %p167
        %p316 = pneg %p191
        %p317 = pneg %p188
        %p318 = pneg %p212
        %p319 = pneg %p209
        %p320 = pneg %p238
        %p321 = pneg %p235
        %s322 = sand.u32 %s225, 1
        %s323 = scalar_lea.sflag [#allocation3], %s322
        %s324 = sand.u32 %s225, 1
        %s325 = smul.addr %s324, 16
        %s326 = scalar_lea.vmem [#allocation2], %s325
        %s327 = smul.u32 64, %s23
        %p328 = scmp.lt.s32.totalorder %s327, 127
        %s329 = scalar_select %p328, %s327, 127
        %s330 = smul.addr %s329, 4
        %s331 = scalar_lea.vmem %s0, %s330
        %s332 = smul.u32 64, %s23
        %s333 = smul.u32 4, %s23
        %v335 = vld [vmem:[%s331] sm:$0xf]
        %v336 = vld [vmem:[%s331 + $0x4] sm:$0xf]
        %v337 = vld [vmem:[%s331 + $0x8] sm:$0xf]
        %v338 = vld [vmem:[%s331 + $0xc] sm:$0xf]
        %v339 = vld [vmem:[%s331 + $0x10] sm:$0xf]
        %v340 = vld [vmem:[%s331 + $0x14] sm:$0xf]
        %v341 = vld [vmem:[%s331 + $0x18] sm:$0xf]
        %v342 = vld [vmem:[%s331 + $0x1c] sm:$0xf]
        %v343 = vld [vmem:[%s331 + $0x20] sm:$0xf]
        %v344 = vld [vmem:[%s331 + $0x24] sm:$0xf]
        %v345 = vld [vmem:[%s331 + $0x28] sm:$0xf]
        %v346 = vld [vmem:[%s331 + $0x2c] sm:$0xf]
        %v347 = vld [vmem:[%s331 + $0x30] sm:$0xf]
        %v348 = vld [vmem:[%s331 + $0x34] sm:$0xf]
        %v349 = vld [vmem:[%s331 + $0x38] sm:$0xf]
        %v350 = vld [vmem:[%s331 + $0x3c] sm:$0xf]
        %v351 = vld [vmem:[%s331 + $0x40] sm:$0xf]
        %v352 = vld [vmem:[%s331 + $0x44] sm:$0xf]
        %v353 = vld [vmem:[%s331 + $0x48] sm:$0xf]
        %v354 = vld [vmem:[%s331 + $0x4c] sm:$0xf]
        %v355 = vld [vmem:[%s331 + $0x50] sm:$0xf]
        %v356 = vld [vmem:[%s331 + $0x54] sm:$0xf]
        %v357 = vld [vmem:[%s331 + $0x58] sm:$0xf]
        %v358 = vld [vmem:[%s331 + $0x5c] sm:$0xf]
        %v359 = vld [vmem:[%s331 + $0x60] sm:$0xf]
        %v360 = vld [vmem:[%s331 + $0x64] sm:$0xf]
        %v361 = vld [vmem:[%s331 + $0x68] sm:$0xf]
        %v362 = vld [vmem:[%s331 + $0x6c] sm:$0xf]
        %v363 = vld [vmem:[%s331 + $0x70] sm:$0xf]
        %v364 = vld [vmem:[%s331 + $0x74] sm:$0xf]
        %v365 = vld [vmem:[%s331 + $0x78] sm:$0xf]
        %v366 = vld [vmem:[%s331 + $0x7c] sm:$0xf]
        %v367 = vld [vmem:[%s331 + $0x80] sm:$0xf]
        %v368 = vld [vmem:[%s331 + $0x84] sm:$0xf]
        %v369 = vld [vmem:[%s331 + $0x88] sm:$0xf]
        %v370 = vld [vmem:[%s331 + $0x8c] sm:$0xf]
        %v371 = vld [vmem:[%s331 + $0x90] sm:$0xf]
        %v372 = vld [vmem:[%s331 + $0x94] sm:$0xf]
        %v373 = vld [vmem:[%s331 + $0x98] sm:$0xf]
        %v374 = vld [vmem:[%s331 + $0x9c] sm:$0xf]
        %v375 = vld [vmem:[%s331 + $0xa0] sm:$0xf]
        %v376 = vld [vmem:[%s331 + $0xa4] sm:$0xf]
        %v377 = vld [vmem:[%s331 + $0xa8] sm:$0xf]
        %v378 = vld [vmem:[%s331 + $0xac] sm:$0xf]
        %v379 = vld [vmem:[%s331 + $0xb0] sm:$0xf]
        %v380 = vld [vmem:[%s331 + $0xb4] sm:$0xf]
        %v381 = vld [vmem:[%s331 + $0xb8] sm:$0xf]
        %v382 = vld [vmem:[%s331 + $0xbc] sm:$0xf]
        %v383 = vld [vmem:[%s331 + $0xc0] sm:$0xf]
        %v384 = vld [vmem:[%s331 + $0xc4] sm:$0xf]
        %v385 = vld [vmem:[%s331 + $0xc8] sm:$0xf]
        %v386 = vld [vmem:[%s331 + $0xcc] sm:$0xf]
        %v387 = vld [vmem:[%s331 + $0xd0] sm:$0xf]
        %v388 = vld [vmem:[%s331 + $0xd4] sm:$0xf]
        %v389 = vld [vmem:[%s331 + $0xd8] sm:$0xf]
        %v390 = vld [vmem:[%s331 + $0xdc] sm:$0xf]
        %v391 = vld [vmem:[%s331 + $0xe0] sm:$0xf]
        %v392 = vld [vmem:[%s331 + $0xe4] sm:$0xf]
        %v393 = vld [vmem:[%s331 + $0xe8] sm:$0xf]
        %v394 = vld [vmem:[%s331 + $0xec] sm:$0xf]
        %v395 = vld [vmem:[%s331 + $0xf0] sm:$0xf]
        %v396 = vld [vmem:[%s331 + $0xf4] sm:$0xf]
        %v397 = vld [vmem:[%s331 + $0xf8] sm:$0xf]
        %v398 = vld [vmem:[%s331 + $0xfc] sm:$0xf]
        %v399 = vld [vmem:[%s1] sm:$0xf]
        %v400 = vld [vmem:[%s1 + $0x4] sm:$0xf]
        %v401 = vld [vmem:[%s1 + $0x8] sm:$0xf]
        %v402 = vld [vmem:[%s1 + $0xc] sm:$0xf]
        %v403 = vld [vmem:[%s1 + $0x10] sm:$0xf]
        %v404 = vld [vmem:[%s1 + $0x14] sm:$0xf]
        %v405 = vld [vmem:[%s1 + $0x18] sm:$0xf]
        %v406 = vld [vmem:[%s1 + $0x1c] sm:$0xf]
        %v407 = vld [vmem:[%s1 + $0x20] sm:$0xf]
        %v408 = vld [vmem:[%s1 + $0x24] sm:$0xf]
        %v409 = vld [vmem:[%s1 + $0x28] sm:$0xf]
        %v410 = vld [vmem:[%s1 + $0x2c] sm:$0xf]
        %v411 = vld [vmem:[%s1 + $0x30] sm:$0xf]
        %v412 = vld [vmem:[%s1 + $0x34] sm:$0xf]
        %v413 = vld [vmem:[%s1 + $0x38] sm:$0xf]
        %v414 = vld [vmem:[%s1 + $0x3c] sm:$0xf]
        %v415 = vld [vmem:[%s2] sm:$0xff]
        %v416 = vld [vmem:[%s2 + $0x8] sm:$0xff]
        %v417 = vld [vmem:[%s2 + $0x10] sm:$0xff]
        %v418 = vld [vmem:[%s2 + $0x18] sm:$0xff]
        %v419 = vld [vmem:[%s2 + $0x20] sm:$0xff]
        %v420 = vld [vmem:[%s2 + $0x28] sm:$0xff]
        %v421 = vld [vmem:[%s2 + $0x30] sm:$0xff]
        %v422 = vld [vmem:[%s2 + $0x38] sm:$0xff]
        %v423 = vld [vmem:[%s2 + $0x40] sm:$0xff]
        %v424 = vld [vmem:[%s2 + $0x48] sm:$0xff]
        %v425 = vld [vmem:[%s2 + $0x50] sm:$0xff]
        %v426 = vld [vmem:[%s2 + $0x58] sm:$0xff]
        %v427 = vld [vmem:[%s2 + $0x60] sm:$0xff]
        %v428 = vld [vmem:[%s2 + $0x68] sm:$0xff]
        %v429 = vld [vmem:[%s2 + $0x70] sm:$0xff]
        %v430 = vld [vmem:[%s2 + $0x78] sm:$0xff]
        %432 = vset.pattern.permute.xlu0 0
        %433 = vperm.xlu0 %432, %v415
        %v434 = vpop.permute.xlu0 %433
        %437 = vset.pattern.permute.xlu0 0
        %438 = vperm.xlu0 %437, %v416
        %v439 = vpop.permute.xlu0 %438
        %442 = vset.pattern.permute.xlu0 0
        %443 = vperm.xlu0 %442, %v417
        %v444 = vpop.permute.xlu0 %443
        %447 = vset.pattern.permute.xlu0 0
        %448 = vperm.xlu0 %447, %v418
        %v449 = vpop.permute.xlu0 %448
        %452 = vset.pattern.permute.xlu0 0
        %453 = vperm.xlu0 %452, %v419
        %v454 = vpop.permute.xlu0 %453
        %457 = vset.pattern.permute.xlu0 0
        %458 = vperm.xlu0 %457, %v420
        %v459 = vpop.permute.xlu0 %458
        %462 = vset.pattern.permute.xlu0 0
        %463 = vperm.xlu0 %462, %v421
        %v464 = vpop.permute.xlu0 %463
        %467 = vset.pattern.permute.xlu0 0
        %468 = vperm.xlu0 %467, %v422
        %v469 = vpop.permute.xlu0 %468
        %472 = vset.pattern.permute.xlu0 0
        %473 = vperm.xlu0 %472, %v423
        %v474 = vpop.permute.xlu0 %473
        %477 = vset.pattern.permute.xlu0 0
        %478 = vperm.xlu0 %477, %v424
        %v479 = vpop.permute.xlu0 %478
        %482 = vset.pattern.permute.xlu0 0
        %483 = vperm.xlu0 %482, %v425
        %v484 = vpop.permute.xlu0 %483
        %487 = vset.pattern.permute.xlu0 0
        %488 = vperm.xlu0 %487, %v426
        %v489 = vpop.permute.xlu0 %488
        %492 = vset.pattern.permute.xlu0 0
        %493 = vperm.xlu0 %492, %v427
        %v494 = vpop.permute.xlu0 %493
        %497 = vset.pattern.permute.xlu0 0
        %498 = vperm.xlu0 %497, %v428
        %v499 = vpop.permute.xlu0 %498
        %502 = vset.pattern.permute.xlu0 0
        %503 = vperm.xlu0 %502, %v429
        %v504 = vpop.permute.xlu0 %503
        %507 = vset.pattern.permute.xlu0 0
        %508 = vperm.xlu0 %507, %v430
        %v509 = vpop.permute.xlu0 %508
        %v527 = vunpack.c.l.b16 %v399
        %v528 = vunpack.c.l.b16 %v400
        %v529 = vunpack.c.l.b16 %v401
        %v530 = vunpack.c.l.b16 %v402
        %v531 = vunpack.c.l.b16 %v403
        %v532 = vunpack.c.l.b16 %v404
        %v533 = vunpack.c.l.b16 %v405
        %v534 = vunpack.c.l.b16 %v406
        %v535 = vunpack.c.l.b16 %v407
        %v536 = vunpack.c.l.b16 %v408
        %v537 = vunpack.c.l.b16 %v409
        %v538 = vunpack.c.l.b16 %v410
        %v539 = vunpack.c.l.b16 %v411
        %v540 = vunpack.c.l.b16 %v412
        %v541 = vunpack.c.l.b16 %v413
        %v542 = vunpack.c.l.b16 %v414
        %v543 = vpack.c.b16 %v528, %v527
        %v544 = vpack.c.b16 %v530, %v529
        %v545 = vpack.c.b16 %v532, %v531
        %v546 = vpack.c.b16 %v534, %v533
        %v547 = vpack.c.b16 %v536, %v535
        %v548 = vpack.c.b16 %v538, %v537
        %v549 = vpack.c.b16 %v540, %v539
        %v550 = vpack.c.b16 %v542, %v541
        %v615 = vunpack.c.l.b16 %v335
        %v616 = vunpack.c.l.b16 %v336
        %v617 = vunpack.c.l.b16 %v337
        %v618 = vunpack.c.l.b16 %v338
        %v619 = vunpack.c.l.b16 %v339
        %v620 = vunpack.c.l.b16 %v340
        %v621 = vunpack.c.l.b16 %v341
        %v622 = vunpack.c.l.b16 %v342
        %v623 = vunpack.c.l.b16 %v343
        %v624 = vunpack.c.l.b16 %v344
        %v625 = vunpack.c.l.b16 %v345
        %v626 = vunpack.c.l.b16 %v346
        %v627 = vunpack.c.l.b16 %v347
        %v628 = vunpack.c.l.b16 %v348
        %v629 = vunpack.c.l.b16 %v349
        %v630 = vunpack.c.l.b16 %v350
        %v631 = vunpack.c.l.b16 %v351
        %v632 = vunpack.c.l.b16 %v352
        %v633 = vunpack.c.l.b16 %v353
        %v634 = vunpack.c.l.b16 %v354
        %v635 = vunpack.c.l.b16 %v355
        %v636 = vunpack.c.l.b16 %v356
        %v637 = vunpack.c.l.b16 %v357
        %v638 = vunpack.c.l.b16 %v358
        %v639 = vunpack.c.l.b16 %v359
        %v640 = vunpack.c.l.b16 %v360
        %v641 = vunpack.c.l.b16 %v361
        %v642 = vunpack.c.l.b16 %v362
        %v643 = vunpack.c.l.b16 %v363
        %v644 = vunpack.c.l.b16 %v364
        %v645 = vunpack.c.l.b16 %v365
        %v646 = vunpack.c.l.b16 %v366
        %v647 = vunpack.c.l.b16 %v367
        %v648 = vunpack.c.l.b16 %v368
        %v649 = vunpack.c.l.b16 %v369
        %v650 = vunpack.c.l.b16 %v370
        %v651 = vunpack.c.l.b16 %v371
        %v652 = vunpack.c.l.b16 %v372
        %v653 = vunpack.c.l.b16 %v373
        %v654 = vunpack.c.l.b16 %v374
        %v655 = vunpack.c.l.b16 %v375
        %v656 = vunpack.c.l.b16 %v376
        %v657 = vunpack.c.l.b16 %v377
        %v658 = vunpack.c.l.b16 %v378
        %v659 = vunpack.c.l.b16 %v379
        %v660 = vunpack.c.l.b16 %v380
        %v661 = vunpack.c.l.b16 %v381
        %v662 = vunpack.c.l.b16 %v382
        %v663 = vunpack.c.l.b16 %v383
        %v664 = vunpack.c.l.b16 %v384
        %v665 = vunpack.c.l.b16 %v385
        %v666 = vunpack.c.l.b16 %v386
        %v667 = vunpack.c.l.b16 %v387
        %v668 = vunpack.c.l.b16 %v388
        %v669 = vunpack.c.l.b16 %v389
        %v670 = vunpack.c.l.b16 %v390
        %v671 = vunpack.c.l.b16 %v391
        %v672 = vunpack.c.l.b16 %v392
        %v673 = vunpack.c.l.b16 %v393
        %v674 = vunpack.c.l.b16 %v394
        %v675 = vunpack.c.l.b16 %v395
        %v676 = vunpack.c.l.b16 %v396
        %v677 = vunpack.c.l.b16 %v397
        %v678 = vunpack.c.l.b16 %v398
        %v679 = vpack.c.b16 %v616, %v615
        %v680 = vpack.c.b16 %v618, %v617
        %v681 = vpack.c.b16 %v620, %v619
        %v682 = vpack.c.b16 %v622, %v621
        %v683 = vpack.c.b16 %v624, %v623
        %v684 = vpack.c.b16 %v626, %v625
        %v685 = vpack.c.b16 %v628, %v627
        %v686 = vpack.c.b16 %v630, %v629
        %v687 = vpack.c.b16 %v632, %v631
        %v688 = vpack.c.b16 %v634, %v633
        %v689 = vpack.c.b16 %v636, %v635
        %v690 = vpack.c.b16 %v638, %v637
        %v691 = vpack.c.b16 %v640, %v639
        %v692 = vpack.c.b16 %v642, %v641
        %v693 = vpack.c.b16 %v644, %v643
        %v694 = vpack.c.b16 %v646, %v645
        %v695 = vpack.c.b16 %v648, %v647
        %v696 = vpack.c.b16 %v650, %v649
        %v697 = vpack.c.b16 %v652, %v651
        %v698 = vpack.c.b16 %v654, %v653
        %v699 = vpack.c.b16 %v656, %v655
        %v700 = vpack.c.b16 %v658, %v657
        %v701 = vpack.c.b16 %v660, %v659
        %v702 = vpack.c.b16 %v662, %v661
        %v703 = vpack.c.b16 %v664, %v663
        %v704 = vpack.c.b16 %v666, %v665
        %v705 = vpack.c.b16 %v668, %v667
        %v706 = vpack.c.b16 %v670, %v669
        %v707 = vpack.c.b16 %v672, %v671
        %v708 = vpack.c.b16 %v674, %v673
        %v709 = vpack.c.b16 %v676, %v675
        %v710 = vpack.c.b16 %v678, %v677
        %vm711 = vcmask 113664
        %v713 = vsel %vm711, %v543, 0
        %v716 = vsel %vm711, %v544, 0
        %v719 = vsel %vm711, %v545, 0
        %v722 = vsel %vm711, %v546, 0
        %v725 = vsel %vm711, %v547, 0
        %v728 = vsel %vm711, %v548, 0
        %v731 = vsel %vm711, %v549, 0
        %v734 = vsel %vm711, %v550, 0
        %v737 = vsel %vm711, %v679, 0
        %v740 = vsel %vm711, %v680, 0
        %v743 = vsel %vm711, %v681, 0
        %v746 = vsel %vm711, %v682, 0
        %v749 = vsel %vm711, %v683, 0
        %v752 = vsel %vm711, %v684, 0
        %v755 = vsel %vm711, %v685, 0
        %v758 = vsel %vm711, %v686, 0
        %v761 = vsel %vm711, %v687, 0
        %v764 = vsel %vm711, %v688, 0
        %v767 = vsel %vm711, %v689, 0
        %v770 = vsel %vm711, %v690, 0
        %v773 = vsel %vm711, %v691, 0
        %v776 = vsel %vm711, %v692, 0
        %v779 = vsel %vm711, %v693, 0
        %v782 = vsel %vm711, %v694, 0
        %v785 = vsel %vm711, %v695, 0
        %v788 = vsel %vm711, %v696, 0
        %v791 = vsel %vm711, %v697, 0
        %v794 = vsel %vm711, %v698, 0
        %v797 = vsel %vm711, %v699, 0
        %v800 = vsel %vm711, %v700, 0
        %v803 = vsel %vm711, %v701, 0
        %v806 = vsel %vm711, %v702, 0
        %v809 = vsel %vm711, %v703, 0
        %v812 = vsel %vm711, %v704, 0
        %v815 = vsel %vm711, %v705, 0
        %v818 = vsel %vm711, %v706, 0
        %v821 = vsel %vm711, %v707, 0
        %v824 = vsel %vm711, %v708, 0
        %v827 = vsel %vm711, %v709, 0
        %v830 = vsel %vm711, %v710, 0
        %832 = vmatprep.subr.bf16.mxu0 0
        %833 = vmatpush1.bf16.xpose.msra.mxu0 %v737
        %834 = vmatprep.subr.bf16.mxu0 0
        %835 = vmatpush1.bf16.xpose.msra.mxu0 %v740
        %836 = vmatprep.subr.bf16.mxu0 0
        %837 = vmatpush1.bf16.xpose.msra.mxu0 %v743
        %838 = vmatprep.subr.bf16.mxu0 0
        %839 = vmatpush1.bf16.xpose.msra.mxu0 %v746
        %840 = vmatprep.subr.bf16.mxu0 0
        %841 = vmatpush1.bf16.xpose.msra.mxu0 %v749
        %842 = vmatprep.subr.bf16.mxu0 0
        %843 = vmatpush1.bf16.xpose.msra.mxu0 %v752
        %844 = vmatprep.subr.bf16.mxu0 0
        %845 = vmatpush1.bf16.xpose.msra.mxu0 %v755
        %846 = vmatprep.subr.bf16.mxu0 0
        %847 = vmatpush1.bf16.xpose.msra.mxu0 %v758
        %848 = vmatprep.subr.bf16.mxu0 0
        %849 = vmatpush1.bf16.xpose.msra.mxu0 %v761
        %850 = vmatprep.subr.bf16.mxu0 0
        %851 = vmatpush1.bf16.xpose.msra.mxu0 %v764
        %852 = vmatprep.subr.bf16.mxu0 0
        %853 = vmatpush1.bf16.xpose.msra.mxu0 %v767
        %854 = vmatprep.subr.bf16.mxu0 0
        %855 = vmatpush1.bf16.xpose.msra.mxu0 %v770
        %856 = vmatprep.subr.bf16.mxu0 0
        %857 = vmatpush1.bf16.xpose.msra.mxu0 %v773
        %858 = vmatprep.subr.bf16.mxu0 0
        %859 = vmatpush1.bf16.xpose.msra.mxu0 %v776
        %860 = vmatprep.subr.bf16.mxu0 0
        %861 = vmatpush1.bf16.xpose.msra.mxu0 %v779
        %862 = vmatprep.subr.bf16.mxu0 0
        %863 = vmatpush1.bf16.xpose.msra.mxu0 %v782
        %864 = vmatprep.mubr.bf16.mxu0 0
        %865 = vmatmul.mubr.bf16.gmra.mrb[0].mxu0 %v713
        %v866 = vpop.f32.mrb[0].mxu0
        %v867 = vadd.f32 %v434, %v866
        %v868 = vpop.f32.mrb[0].mxu0
        %v869 = vadd.f32 %v434, %v868
        %v870 = vpop.f32.mrb[0].mxu0
        %v871 = vadd.f32 %v439, %v870
        %v872 = vpop.f32.mrb[0].mxu0
        %v873 = vadd.f32 %v439, %v872
        %874 = vmatprep.mubr.bf16.mxu0 0
        %875 = vmatmul.mubr.bf16.gmra.mrb[0].mxu0 %v716
        %v876 = vpop.f32.mrb[0].mxu0
        %v877 = vadd.f32 %v444, %v876
        %v878 = vpop.f32.mrb[0].mxu0
        %v879 = vadd.f32 %v444, %v878
        %v880 = vpop.f32.mrb[0].mxu0
        %v881 = vadd.f32 %v449, %v880
        %v882 = vpop.f32.mrb[0].mxu0
        %v883 = vadd.f32 %v449, %v882
        %884 = vmatprep.mubr.bf16.mxu0 0
        %885 = vmatmul.mubr.bf16.gmra.mrb[0].mxu0 %v719
        %v886 = vpop.f32.mrb[0].mxu0
        %v887 = vadd.f32 %v454, %v886
        %v888 = vpop.f32.mrb[0].mxu0
        %v889 = vadd.f32 %v454, %v888
        %v890 = vpop.f32.mrb[0].mxu0
        %v891 = vadd.f32 %v459, %v890
        %v892 = vpop.f32.mrb[0].mxu0
        %v893 = vadd.f32 %v459, %v892
        %894 = vmatprep.mubr.bf16.mxu0 0
        %895 = vmatmul.mubr.bf16.gmra.mrb[0].mxu0 %v722
        %v896 = vpop.f32.mrb[0].mxu0
        %v897 = vadd.f32 %v464, %v896
        %v898 = vpop.f32.mrb[0].mxu0
        %v899 = vadd.f32 %v464, %v898
        %v900 = vpop.f32.mrb[0].mxu0
        %v901 = vadd.f32 %v469, %v900
        %v902 = vpop.f32.mrb[0].mxu0
        %v903 = vadd.f32 %v469, %v902
        %904 = vmatprep.mubr.bf16.mxu0 0
        %905 = vmatmul.mubr.bf16.gmra.mrb[0].mxu0 %v725
        %v906 = vpop.f32.mrb[0].mxu0
        %v907 = vadd.f32 %v474, %v906
        %v908 = vpop.f32.mrb[0].mxu0
        %v909 = vadd.f32 %v474, %v908
        %v910 = vpop.f32.mrb[0].mxu0
        %v911 = vadd.f32 %v479, %v910
        %v912 = vpop.f32.mrb[0].mxu0
        %v913 = vadd.f32 %v479, %v912
        %914 = vmatprep.mubr.bf16.mxu0 0
        %915 = vmatmul.mubr.bf16.gmra.mrb[0].mxu0 %v728
        %v916 = vpop.f32.mrb[0].mxu0
        %v917 = vadd.f32 %v484, %v916
        %v918 = vpop.f32.mrb[0].mxu0
        %v919 = vadd.f32 %v484, %v918
        %v920 = vpop.f32.mrb[0].mxu0
        %v921 = vadd.f32 %v489, %v920
        %v922 = vpop.f32.mrb[0].mxu0
        %v923 = vadd.f32 %v489, %v922
        %924 = vmatprep.mubr.bf16.mxu0 0
        %925 = vmatmul.mubr.bf16.gmra.mrb[0].mxu0 %v731
        %v926 = vpop.f32.mrb[0].mxu0
        %v927 = vadd.f32 %v494, %v926
        %v928 = vpop.f32.mrb[0].mxu0
        %v929 = vadd.f32 %v494, %v928
        %v930 = vpop.f32.mrb[0].mxu0
        %v931 = vadd.f32 %v499, %v930
        %v932 = vpop.f32.mrb[0].mxu0
        %v933 = vadd.f32 %v499, %v932
        %934 = vmatprep.mubr.bf16.mxu0 0
        %935 = vmatmul.mubr.bf16.gmra.mrb[0].mxu0 %v734
        %v936 = vpop.f32.mrb[0].mxu0
        %v937 = vadd.f32 %v504, %v936
        %v938 = vpop.f32.mrb[0].mxu0
        %v939 = vadd.f32 %v504, %v938
        %v940 = vpop.f32.mrb[0].mxu0
        %v941 = vadd.f32 %v509, %v940
        %v942 = vpop.f32.mrb[0].mxu0
        %v943 = vadd.f32 %v509, %v942
        %944 = vdwg.mxu0
        %945 = vmatprep.subr.bf16.mxu0 0
        %946 = vmatpush1.bf16.xpose.msra.mxu0 %v785
        %947 = vmatprep.subr.bf16.mxu0 0
        %948 = vmatpush1.bf16.xpose.msra.mxu0 %v788
        %949 = vmatprep.subr.bf16.mxu0 0
        %950 = vmatpush1.bf16.xpose.msra.mxu0 %v791
        %951 = vmatprep.subr.bf16.mxu0 0
        %952 = vmatpush1.bf16.xpose.msra.mxu0 %v794
        %953 = vmatprep.subr.bf16.mxu0 0
        %954 = vmatpush1.bf16.xpose.msra.mxu0 %v797
        %955 = vmatprep.subr.bf16.mxu0 0
        %956 = vmatpush1.bf16.xpose.msra.mxu0 %v800
        %957 = vmatprep.subr.bf16.mxu0 0
        %958 = vmatpush1.bf16.xpose.msra.mxu0 %v803
        %959 = vmatprep.subr.bf16.mxu0 0
        %960 = vmatpush1.bf16.xpose.msra.mxu0 %v806
        %961 = vmatprep.subr.bf16.mxu0 0
        %962 = vmatpush1.bf16.xpose.msra.mxu0 %v809
        %963 = vmatprep.subr.bf16.mxu0 0
        %964 = vmatpush1.bf16.xpose.msra.mxu0 %v812
        %965 = vmatprep.subr.bf16.mxu0 0
        %966 = vmatpush1.bf16.xpose.msra.mxu0 %v815
        %967 = vmatprep.subr.bf16.mxu0 0
        %968 = vmatpush1.bf16.xpose.msra.mxu0 %v818
        %969 = vmatprep.subr.bf16.mxu0 0
        %970 = vmatpush1.bf16.xpose.msra.mxu0 %v821
        %971 = vmatprep.subr.bf16.mxu0 0
        %972 = vmatpush1.bf16.xpose.msra.mxu0 %v824
        %973 = vmatprep.subr.bf16.mxu0 0
        %974 = vmatpush1.bf16.xpose.msra.mxu0 %v827
        %975 = vmatprep.subr.bf16.mxu0 0
        %976 = vmatpush1.bf16.xpose.msra.mxu0 %v830
        %977 = vmatprep.mubr.bf16.mxu0 0
        %978 = vmatmul.mubr.bf16.gmra.mrb[0].mxu0 %v713
        %v979 = vpop.f32.mrb[0].mxu0
        %v980 = vadd.f32 %v434, %v979
        %v981 = vpop.f32.mrb[0].mxu0
        %v982 = vadd.f32 %v434, %v981
        %v983 = vpop.f32.mrb[0].mxu0
        %v984 = vadd.f32 %v439, %v983
        %v985 = vpop.f32.mrb[0].mxu0
        %v986 = vadd.f32 %v439, %v985
        %987 = vmatprep.mubr.bf16.mxu0 0
        %988 = vmatmul.mubr.bf16.gmra.mrb[0].mxu0 %v716
        %v989 = vpop.f32.mrb[0].mxu0
        %v990 = vadd.f32 %v444, %v989
        %v991 = vpop.f32.mrb[0].mxu0
        %v992 = vadd.f32 %v444, %v991
        %v993 = vpop.f32.mrb[0].mxu0
        %v994 = vadd.f32 %v449, %v993
        %v995 = vpop.f32.mrb[0].mxu0
        %v996 = vadd.f32 %v449, %v995
        %997 = vmatprep.mubr.bf16.mxu0 0
        %998 = vmatmul.mubr.bf16.gmra.mrb[0].mxu0 %v719
        %v999 = vpop.f32.mrb[0].mxu0
        %v1000 = vadd.f32 %v454, %v999
        %v1001 = vpop.f32.mrb[0].mxu0
        %v1002 = vadd.f32 %v454, %v1001
        %v1003 = vpop.f32.mrb[0].mxu0
        %v1004 = vadd.f32 %v459, %v1003
        %v1005 = vpop.f32.mrb[0].mxu0
        %v1006 = vadd.f32 %v459, %v1005
        %1007 = vmatprep.mubr.bf16.mxu0 0
        %1008 = vmatmul.mubr.bf16.gmra.mrb[0].mxu0 %v722
        %v1009 = vpop.f32.mrb[0].mxu0
        %v1010 = vadd.f32 %v464, %v1009
        %v1011 = vpop.f32.mrb[0].mxu0
        %v1012 = vadd.f32 %v464, %v1011
        %v1013 = vpop.f32.mrb[0].mxu0
        %v1014 = vadd.f32 %v469, %v1013
        %v1015 = vpop.f32.mrb[0].mxu0
        %v1016 = vadd.f32 %v469, %v1015
        %1017 = vmatprep.mubr.bf16.mxu0 0
        %1018 = vmatmul.mubr.bf16.gmra.mrb[0].mxu0 %v725
        %v1019 = vpop.f32.mrb[0].mxu0
        %v1020 = vadd.f32 %v474, %v1019
        %v1021 = vpop.f32.mrb[0].mxu0
        %v1022 = vadd.f32 %v474, %v1021
        %v1023 = vpop.f32.mrb[0].mxu0
        %v1024 = vadd.f32 %v479, %v1023
        %v1025 = vpop.f32.mrb[0].mxu0
        %v1026 = vadd.f32 %v479, %v1025
        %1027 = vmatprep.mubr.bf16.mxu0 0
        %1028 = vmatmul.mubr.bf16.gmra.mrb[0].mxu0 %v728
        %v1029 = vpop.f32.mrb[0].mxu0
        %v1030 = vadd.f32 %v484, %v1029
        %v1031 = vpop.f32.mrb[0].mxu0
        %v1032 = vadd.f32 %v484, %v1031
        %v1033 = vpop.f32.mrb[0].mxu0
        %v1034 = vadd.f32 %v489, %v1033
        %v1035 = vpop.f32.mrb[0].mxu0
        %v1036 = vadd.f32 %v489, %v1035
        %1037 = vmatprep.mubr.bf16.mxu0 0
        %1038 = vmatmul.mubr.bf16.gmra.mrb[0].mxu0 %v731
        %v1039 = vpop.f32.mrb[0].mxu0
        %v1040 = vadd.f32 %v494, %v1039
        %v1041 = vpop.f32.mrb[0].mxu0
        %v1042 = vadd.f32 %v494, %v1041
        %v1043 = vpop.f32.mrb[0].mxu0
        %v1044 = vadd.f32 %v499, %v1043
        %v1045 = vpop.f32.mrb[0].mxu0
        %v1046 = vadd.f32 %v499, %v1045
        %1047 = vmatprep.mubr.bf16.mxu0 0
        %1048 = vmatmul.mubr.bf16.gmra.mrb[0].mxu0 %v734
        %v1049 = vpop.f32.mrb[0].mxu0
        %v1050 = vadd.f32 %v504, %v1049
        %v1051 = vpop.f32.mrb[0].mxu0
        %v1052 = vadd.f32 %v504, %v1051
        %v1053 = vpop.f32.mrb[0].mxu0
        %v1054 = vadd.f32 %v509, %v1053
        %v1055 = vpop.f32.mrb[0].mxu0
        %v1056 = vadd.f32 %v509, %v1055
        %1057 = vdwg.mxu0
        %v1058 = vmul.f32 %v867, 0.01
        %v1059 = vmul.f32 %v869, 0.01
        %v1060 = vmul.f32 %v980, 0.01
        %v1061 = vmul.f32 %v982, 0.01
        %v1062 = vmul.f32 %v871, 0.01
        %v1063 = vmul.f32 %v873, 0.01
        %v1064 = vmul.f32 %v984, 0.01
        %v1065 = vmul.f32 %v986, 0.01
        %v1066 = vmul.f32 %v877, 0.01
        %v1067 = vmul.f32 %v879, 0.01
        %v1068 = vmul.f32 %v990, 0.01
        %v1069 = vmul.f32 %v992, 0.01
        %v1070 = vmul.f32 %v881, 0.01
        %v1071 = vmul.f32 %v883, 0.01
        %v1072 = vmul.f32 %v994, 0.01
        %v1073 = vmul.f32 %v996, 0.01
        %v1074 = vmul.f32 %v887, 0.01
        %v1075 = vmul.f32 %v889, 0.01
        %v1076 = vmul.f32 %v1000, 0.01
        %v1077 = vmul.f32 %v1002, 0.01
        %v1078 = vmul.f32 %v891, 0.01
        %v1079 = vmul.f32 %v893, 0.01
        %v1080 = vmul.f32 %v1004, 0.01
        %v1081 = vmul.f32 %v1006, 0.01
        %v1082 = vmul.f32 %v897, 0.01
        %v1083 = vmul.f32 %v899, 0.01
        %v1084 = vmul.f32 %v1010, 0.01
        %v1085 = vmul.f32 %v1012, 0.01
        %v1086 = vmul.f32 %v901, 0.01
        %v1087 = vmul.f32 %v903, 0.01
        %v1088 = vmul.f32 %v1014, 0.01
        %v1089 = vmul.f32 %v1016, 0.01
        %v1090 = vmul.f32 %v907, 0.01
        %v1091 = vmul.f32 %v909, 0.01
        %v1092 = vmul.f32 %v1020, 0.01
        %v1093 = vmul.f32 %v1022, 0.01
        %v1094 = vmul.f32 %v911, 0.01
        %v1095 = vmul.f32 %v913, 0.01
        %v1096 = vmul.f32 %v1024, 0.01
        %v1097 = vmul.f32 %v1026, 0.01
        %v1098 = vmul.f32 %v917, 0.01
        %v1099 = vmul.f32 %v919, 0.01
        %v1100 = vmul.f32 %v1030, 0.01
        %v1101 = vmul.f32 %v1032, 0.01
        %v1102 = vmul.f32 %v921, 0.01
        %v1103 = vmul.f32 %v923, 0.01
        %v1104 = vmul.f32 %v1034, 0.01
        %v1105 = vmul.f32 %v1036, 0.01
        %v1106 = vmul.f32 %v927, 0.01
        %v1107 = vmul.f32 %v929, 0.01
        %v1108 = vmul.f32 %v1040, 0.01
        %v1109 = vmul.f32 %v1042, 0.01
        %v1110 = vmul.f32 %v931, 0.01
        %v1111 = vmul.f32 %v933, 0.01
        %v1112 = vmul.f32 %v1044, 0.01
        %v1113 = vmul.f32 %v1046, 0.01
        %v1114 = vmul.f32 %v937, 0.01
        %v1115 = vmul.f32 %v939, 0.01
        %v1116 = vmul.f32 %v1050, 0.01
        %v1117 = vmul.f32 %v1052, 0.01
        %v1118 = vmul.f32 %v941, 0.01
        %v1119 = vmul.f32 %v943, 0.01
        %v1120 = vmul.f32 %v1054, 0.01
        %v1121 = vmul.f32 %v1056, 0.01
        %v1122 = vmax.f32 %v867, %v1058
        %v1123 = vmax.f32 %v869, %v1059
        %v1124 = vmax.f32 %v980, %v1060
        %v1125 = vmax.f32 %v982, %v1061
        %v1126 = vmax.f32 %v871, %v1062
        %v1127 = vmax.f32 %v873, %v1063
        %v1128 = vmax.f32 %v984, %v1064
        %v1129 = vmax.f32 %v986, %v1065
        %v1130 = vmax.f32 %v877, %v1066
        %v1131 = vmax.f32 %v879, %v1067
        %v1132 = vmax.f32 %v990, %v1068
        %v1133 = vmax.f32 %v992, %v1069
        %v1134 = vmax.f32 %v881, %v1070
        %v1135 = vmax.f32 %v883, %v1071
        %v1136 = vmax.f32 %v994, %v1072
        %v1137 = vmax.f32 %v996, %v1073
        %v1138 = vmax.f32 %v887, %v1074
        %v1139 = vmax.f32 %v889, %v1075
        %v1140 = vmax.f32 %v1000, %v1076
        %v1141 = vmax.f32 %v1002, %v1077
        %v1142 = vmax.f32 %v891, %v1078
        %v1143 = vmax.f32 %v893, %v1079
        %v1144 = vmax.f32 %v1004, %v1080
        %v1145 = vmax.f32 %v1006, %v1081
        %v1146 = vmax.f32 %v897, %v1082
        %v1147 = vmax.f32 %v899, %v1083
        %v1148 = vmax.f32 %v1010, %v1084
        %v1149 = vmax.f32 %v1012, %v1085
        %v1150 = vmax.f32 %v901, %v1086
        %v1151 = vmax.f32 %v903, %v1087
        %v1152 = vmax.f32 %v1014, %v1088
        %v1153 = vmax.f32 %v1016, %v1089
        %v1154 = vmax.f32 %v907, %v1090
        %v1155 = vmax.f32 %v909, %v1091
        %v1156 = vmax.f32 %v1020, %v1092
        %v1157 = vmax.f32 %v1022, %v1093
        %v1158 = vmax.f32 %v911, %v1094
        %v1159 = vmax.f32 %v913, %v1095
        %v1160 = vmax.f32 %v1024, %v1096
        %v1161 = vmax.f32 %v1026, %v1097
        %v1162 = vmax.f32 %v917, %v1098
        %v1163 = vmax.f32 %v919, %v1099
        %v1164 = vmax.f32 %v1030, %v1100
        %v1165 = vmax.f32 %v1032, %v1101
        %v1166 = vmax.f32 %v921, %v1102
        %v1167 = vmax.f32 %v923, %v1103
        %v1168 = vmax.f32 %v1034, %v1104
        %v1169 = vmax.f32 %v1036, %v1105
        %v1170 = vmax.f32 %v927, %v1106
        %v1171 = vmax.f32 %v929, %v1107
        %v1172 = vmax.f32 %v1040, %v1108
        %v1173 = vmax.f32 %v1042, %v1109
        %v1174 = vmax.f32 %v931, %v1110
        %v1175 = vmax.f32 %v933, %v1111
        %v1176 = vmax.f32 %v1044, %v1112
        %v1177 = vmax.f32 %v1046, %v1113
        %v1178 = vmax.f32 %v937, %v1114
        %v1179 = vmax.f32 %v939, %v1115
        %v1180 = vmax.f32 %v1050, %v1116
        %v1181 = vmax.f32 %v1052, %v1117
        %v1182 = vmax.f32 %v941, %v1118
        %v1183 = vmax.f32 %v943, %v1119
        %v1184 = vmax.f32 %v1054, %v1120
        %v1185 = vmax.f32 %v1056, %v1121
        %v1186 = vmax.f32 %v1122, %v1154
        %v1187 = vmax.f32 %v1123, %v1155
        %v1188 = vmax.f32 %v1124, %v1156
        %v1189 = vmax.f32 %v1125, %v1157
        %v1190 = vmax.f32 %v1126, %v1158
        %v1191 = vmax.f32 %v1127, %v1159
        %v1192 = vmax.f32 %v1128, %v1160
        %v1193 = vmax.f32 %v1129, %v1161
        %v1194 = vmax.f32 %v1130, %v1162
        %v1195 = vmax.f32 %v1131, %v1163
        %v1196 = vmax.f32 %v1132, %v1164
        %v1197 = vmax.f32 %v1133, %v1165
        %v1198 = vmax.f32 %v1134, %v1166
        %v1199 = vmax.f32 %v1135, %v1167
        %v1200 = vmax.f32 %v1136, %v1168
        %v1201 = vmax.f32 %v1137, %v1169
        %v1202 = vmax.f32 %v1138, %v1170
        %v1203 = vmax.f32 %v1139, %v1171
        %v1204 = vmax.f32 %v1140, %v1172
        %v1205 = vmax.f32 %v1141, %v1173
        %v1206 = vmax.f32 %v1142, %v1174
        %v1207 = vmax.f32 %v1143, %v1175
        %v1208 = vmax.f32 %v1144, %v1176
        %v1209 = vmax.f32 %v1145, %v1177
        %v1210 = vmax.f32 %v1146, %v1178
        %v1211 = vmax.f32 %v1147, %v1179
        %v1212 = vmax.f32 %v1148, %v1180
        %v1213 = vmax.f32 %v1149, %v1181
        %v1214 = vmax.f32 %v1150, %v1182
        %v1215 = vmax.f32 %v1151, %v1183
        %v1216 = vmax.f32 %v1152, %v1184
        %v1217 = vmax.f32 %v1153, %v1185
        %v1218 = vld [vmem:[%s3] sm:$0xf]
        %v1219 = vld [vmem:[%s3 + $0x4] sm:$0xf]
        %v1220 = vld [vmem:[%s3 + $0x8] sm:$0xf]
        %v1221 = vld [vmem:[%s3 + $0xc] sm:$0xf]
        %v1222 = vld [vmem:[%s4] sm:$0xff]
        %v1223 = vld [vmem:[%s4 + $0x8] sm:$0xff]
        %v1224 = vld [vmem:[%s4 + $0x10] sm:$0xff]
        %v1225 = vld [vmem:[%s4 + $0x18] sm:$0xff]
        %v1226 = vpack.c.bf16 %v1190, %v1186
        %v1227 = vpack.c.bf16 %v1191, %v1187
        %v1228 = vpack.c.bf16 %v1192, %v1188
        %v1229 = vpack.c.bf16 %v1193, %v1189
        %v1230 = vpack.c.bf16 %v1198, %v1194
        %v1231 = vpack.c.bf16 %v1199, %v1195
        %v1232 = vpack.c.bf16 %v1200, %v1196
        %v1233 = vpack.c.bf16 %v1201, %v1197
        %v1234 = vpack.c.bf16 %v1206, %v1202
        %v1235 = vpack.c.bf16 %v1207, %v1203
        %v1236 = vpack.c.bf16 %v1208, %v1204
        %v1237 = vpack.c.bf16 %v1209, %v1205
        %v1238 = vpack.c.bf16 %v1214, %v1210
        %v1239 = vpack.c.bf16 %v1215, %v1211
        %v1240 = vpack.c.bf16 %v1216, %v1212
        %v1241 = vpack.c.bf16 %v1217, %v1213
        %1243 = vset.pattern.permute.xlu0 0
        %1244 = vperm.xlu0 %1243, %v1222
        %v1245 = vpop.permute.xlu0 %1244
        %1248 = vset.pattern.permute.xlu0 0
        %1249 = vperm.xlu0 %1248, %v1223
        %v1250 = vpop.permute.xlu0 %1249
        %1253 = vset.pattern.permute.xlu0 0
        %1254 = vperm.xlu0 %1253, %v1224
        %v1255 = vpop.permute.xlu0 %1254
        %1258 = vset.pattern.permute.xlu0 0
        %1259 = vperm.xlu0 %1258, %v1225
        %v1260 = vpop.permute.xlu0 %1259
        %v1266 = vunpack.c.l.b16 %v1218
        %v1267 = vunpack.c.l.b16 %v1219
        %v1268 = vunpack.c.l.b16 %v1220
        %v1269 = vunpack.c.l.b16 %v1221
        %v1270 = vpack.c.b16 %v1267, %v1266
        %v1271 = vpack.c.b16 %v1269, %v1268
        %vm1272 = vcmask 523264
        %v1274 = vsel %vm1272, %v1270, 0
        %v1277 = vsel %vm1272, %v1271, 0
        %1279 = vmatprep.subr.bf16.mxu0 %v1227
        %1280 = vmatpush1.bf16.msra.mxu0 %v1226
        %1281 = vmatprep.subr.bf16.mxu0 %v1231
        %1282 = vmatpush1.bf16.msra.mxu0 %v1230
        %1283 = vmatprep.subr.bf16.mxu0 %v1235
        %1284 = vmatpush1.bf16.msra.mxu0 %v1234
        %1285 = vmatprep.subr.bf16.mxu0 %v1239
        %1286 = vmatpush1.bf16.msra.mxu0 %v1238
        %1287 = vmatprep.subr.bf16.mxu0 0
        %1288 = vmatpush1.bf16.msra.mxu0 0
        %1289 = vmatprep.subr.bf16.mxu0 0
        %1290 = vmatpush1.bf16.msra.mxu0 0
        %1291 = vmatprep.subr.bf16.mxu0 0
        %1292 = vmatpush1.bf16.msra.mxu0 0
        %1293 = vmatprep.subr.bf16.mxu0 0
        %1294 = vmatpush1.bf16.msra.mxu0 0
        %1295 = vmatprep.subr.bf16.mxu0 0
        %1296 = vmatpush1.bf16.msra.mxu0 0
        %1297 = vmatprep.subr.bf16.mxu0 0
        %1298 = vmatpush1.bf16.msra.mxu0 0
        %1299 = vmatprep.subr.bf16.mxu0 0
        %1300 = vmatpush1.bf16.msra.mxu0 0
        %1301 = vmatprep.subr.bf16.mxu0 0
        %1302 = vmatpush1.bf16.msra.mxu0 0
        %1303 = vmatprep.subr.bf16.mxu0 0
        %1304 = vmatpush1.bf16.msra.mxu0 0
        %1305 = vmatprep.subr.bf16.mxu0 0
        %1306 = vmatpush1.bf16.msra.mxu0 0
        %1307 = vmatprep.subr.bf16.mxu0 0
        %1308 = vmatpush1.bf16.msra.mxu0 0
        %1309 = vmatprep.subr.bf16.mxu0 0
        %1310 = vmatpush1.bf16.msra.mxu0 0
        %1311 = vmatprep.mubr.bf16.mxu0 0
        %1312 = vmatmul.mubr.bf16.gmra.mrb[0].mxu0 %v1274
        %v1313 = vpop.f32.mrb[0].mxu0
        %v1314 = vadd.f32 %v1245, %v1313
        %v1315 = vpop.f32.mrb[0].mxu0
        %v1316 = vadd.f32 %v1245, %v1315
        %v1317 = vpop.f32.mrb[0].mxu0
        %v1318 = vadd.f32 %v1250, %v1317
        %v1319 = vpop.f32.mrb[0].mxu0
        %v1320 = vadd.f32 %v1250, %v1319
        %1321 = vmatprep.mubr.bf16.mxu0 0
        %1322 = vmatmul.mubr.bf16.gmra.mrb[0].mxu0 %v1277
        %v1323 = vpop.f32.mrb[0].mxu0
        %v1324 = vadd.f32 %v1255, %v1323
        %v1325 = vpop.f32.mrb[0].mxu0
        %v1326 = vadd.f32 %v1255, %v1325
        %v1327 = vpop.f32.mrb[0].mxu0
        %v1328 = vadd.f32 %v1260, %v1327
        %v1329 = vpop.f32.mrb[0].mxu0
        %v1330 = vadd.f32 %v1260, %v1329
        %1331 = vdwg.mxu0
        %1332 = vmatprep.subr.bf16.mxu0 %v1229
        %1333 = vmatpush1.bf16.msra.mxu0 %v1228
        %1334 = vmatprep.subr.bf16.mxu0 %v1233
        %1335 = vmatpush1.bf16.msra.mxu0 %v1232
        %1336 = vmatprep.subr.bf16.mxu0 %v1237
        %1337 = vmatpush1.bf16.msra.mxu0 %v1236
        %1338 = vmatprep.subr.bf16.mxu0 %v1241
        %1339 = vmatpush1.bf16.msra.mxu0 %v1240
        %1340 = vmatprep.subr.bf16.mxu0 0
        %1341 = vmatpush1.bf16.msra.mxu0 0
        %1342 = vmatprep.subr.bf16.mxu0 0
        %1343 = vmatpush1.bf16.msra.mxu0 0
        %1344 = vmatprep.subr.bf16.mxu0 0
        %1345 = vmatpush1.bf16.msra.mxu0 0
        %1346 = vmatprep.subr.bf16.mxu0 0
        %1347 = vmatpush1.bf16.msra.mxu0 0
        %1348 = vmatprep.subr.bf16.mxu0 0
        %1349 = vmatpush1.bf16.msra.mxu0 0
        %1350 = vmatprep.subr.bf16.mxu0 0
        %1351 = vmatpush1.bf16.msra.mxu0 0
        %1352 = vmatprep.subr.bf16.mxu0 0
        %1353 = vmatpush1.bf16.msra.mxu0 0
        %1354 = vmatprep.subr.bf16.mxu0 0
        %1355 = vmatpush1.bf16.msra.mxu0 0
        %1356 = vmatprep.subr.bf16.mxu0 0
        %1357 = vmatpush1.bf16.msra.mxu0 0
        %1358 = vmatprep.subr.bf16.mxu0 0
        %1359 = vmatpush1.bf16.msra.mxu0 0
        %1360 = vmatprep.subr.bf16.mxu0 0
        %1361 = vmatpush1.bf16.msra.mxu0 0
        %1362 = vmatprep.subr.bf16.mxu0 0
        %1363 = vmatpush1.bf16.msra.mxu0 0
        %1364 = vmatprep.mubr.bf16.mxu0 0
        %1365 = vmatmul.mubr.bf16.gmra.mrb[0].mxu0 %v1274
        %v1366 = vpop.f32.mrb[0].mxu0
        %v1367 = vadd.f32 %v1245, %v1366
        %v1368 = vpop.f32.mrb[0].mxu0
        %v1369 = vadd.f32 %v1245, %v1368
        %v1370 = vpop.f32.mrb[0].mxu0
        %v1371 = vadd.f32 %v1250, %v1370
        %v1372 = vpop.f32.mrb[0].mxu0
        %v1373 = vadd.f32 %v1250, %v1372
        %1374 = vmatprep.mubr.bf16.mxu0 0
        %1375 = vmatmul.mubr.bf16.gmra.mrb[0].mxu0 %v1277
        %v1376 = vpop.f32.mrb[0].mxu0
        %v1377 = vadd.f32 %v1255, %v1376
        %v1378 = vpop.f32.mrb[0].mxu0
        %v1379 = vadd.f32 %v1255, %v1378
        %v1380 = vpop.f32.mrb[0].mxu0
        %v1381 = vadd.f32 %v1260, %v1380
        %v1382 = vpop.f32.mrb[0].mxu0
        %v1383 = vadd.f32 %v1260, %v1382
        %1384 = vdwg.mxu0
        %v1385 = vmul.f32 %v1314, 0.01
        %v1386 = vmul.f32 %v1316, 0.01
        %v1387 = vmul.f32 %v1367, 0.01
        %v1388 = vmul.f32 %v1369, 0.01
        %v1389 = vmul.f32 %v1318, 0.01
        %v1390 = vmul.f32 %v1320, 0.01
        %v1391 = vmul.f32 %v1371, 0.01
        %v1392 = vmul.f32 %v1373, 0.01
        %v1393 = vmul.f32 %v1324, 0.01
        %v1394 = vmul.f32 %v1326, 0.01
        %v1395 = vmul.f32 %v1377, 0.01
        %v1396 = vmul.f32 %v1379, 0.01
        %v1397 = vmul.f32 %v1328, 0.01
        %v1398 = vmul.f32 %v1330, 0.01
        %v1399 = vmul.f32 %v1381, 0.01
        %v1400 = vmul.f32 %v1383, 0.01
        %v1401 = vmax.f32 %v1314, %v1385
        %v1402 = vmax.f32 %v1316, %v1386
        %v1403 = vmax.f32 %v1367, %v1387
        %v1404 = vmax.f32 %v1369, %v1388
        %v1405 = vmax.f32 %v1318, %v1389
        %v1406 = vmax.f32 %v1320, %v1390
        %v1407 = vmax.f32 %v1371, %v1391
        %v1408 = vmax.f32 %v1373, %v1392
        %v1409 = vmax.f32 %v1324, %v1393
        %v1410 = vmax.f32 %v1326, %v1394
        %v1411 = vmax.f32 %v1377, %v1395
        %v1412 = vmax.f32 %v1379, %v1396
        %v1413 = vmax.f32 %v1328, %v1397
        %v1414 = vmax.f32 %v1330, %v1398
        %v1415 = vmax.f32 %v1381, %v1399
        %v1416 = vmax.f32 %v1383, %v1400
        %v1417 = vmax.f32 %v1401, %v1409
        %v1418 = vmax.f32 %v1402, %v1410
        %v1419 = vmax.f32 %v1403, %v1411
        %v1420 = vmax.f32 %v1404, %v1412
        %v1421 = vmax.f32 %v1405, %v1413
        %v1422 = vmax.f32 %v1406, %v1414
        %v1423 = vmax.f32 %v1407, %v1415
        %v1424 = vmax.f32 %v1408, %v1416
        %v1425 = vld [vmem:[%s5] sm:$0xf]
        %v1426 = vld [vmem:[%s6] sm:$0xff]
        %v1427 = vpack.c.bf16 %v1421, %v1417
        %v1428 = vpack.c.bf16 %v1422, %v1418
        %v1429 = vpack.c.bf16 %v1423, %v1419
        %v1430 = vpack.c.bf16 %v1424, %v1420
        %1432 = vset.pattern.permute.xlu0 0
        %1433 = vperm.xlu0 %1432, %v1426
        %v1434 = vpop.permute.xlu0 %1433
        %vm1436 = vcmask 130048
        %v1438 = vsel %vm1436, %v1425, 0
        %1440 = vmatprep.subr.bf16.mxu0 %v1428
        %1441 = vmatpush1.bf16.msra.mxu0 %v1427
        %1442 = vmatprep.subr.bf16.mxu0 0
        %1443 = vmatpush1.bf16.msra.mxu0 0
        %1444 = vmatprep.subr.bf16.mxu0 0
        %1445 = vmatpush1.bf16.msra.mxu0 0
        %1446 = vmatprep.subr.bf16.mxu0 0
        %1447 = vmatpush1.bf16.msra.mxu0 0
        %1448 = vmatprep.subr.bf16.mxu0 0
        %1449 = vmatpush1.bf16.msra.mxu0 0
        %1450 = vmatprep.subr.bf16.mxu0 0
        %1451 = vmatpush1.bf16.msra.mxu0 0
        %1452 = vmatprep.subr.bf16.mxu0 0
        %1453 = vmatpush1.bf16.msra.mxu0 0
        %1454 = vmatprep.subr.bf16.mxu0 0
        %1455 = vmatpush1.bf16.msra.mxu0 0
        %1456 = vmatprep.subr.bf16.mxu0 0
        %1457 = vmatpush1.bf16.msra.mxu0 0
        %1458 = vmatprep.subr.bf16.mxu0 0
        %1459 = vmatpush1.bf16.msra.mxu0 0
        %1460 = vmatprep.subr.bf16.mxu0 0
        %1461 = vmatpush1.bf16.msra.mxu0 0
        %1462 = vmatprep.subr.bf16.mxu0 0
        %1463 = vmatpush1.bf16.msra.mxu0 0
        %1464 = vmatprep.subr.bf16.mxu0 0
        %1465 = vmatpush1.bf16.msra.mxu0 0
        %1466 = vmatprep.subr.bf16.mxu0 0
        %1467 = vmatpush1.bf16.msra.mxu0 0
        %1468 = vmatprep.subr.bf16.mxu0 0
        %1469 = vmatpush1.bf16.msra.mxu0 0
        %1470 = vmatprep.subr.bf16.mxu0 0
        %1471 = vmatpush1.bf16.msra.mxu0 0
        %1472 = vmatprep.mubr.bf16.mxu0 0
        %1473 = vmatmul.mubr.bf16.gmra.mrb[0].mxu0 %v1438
        %v1474 = vpop.f32.mrb[0].mxu0
        %v1475 = vadd.f32 %v1434, %v1474
        %v1476 = vpop.f32.mrb[0].mxu0
        %v1477 = vadd.f32 %v1434, %v1476
        %v1478 = vpop.f32.mrb[0].mxu0
        %v1479 = vpop.f32.mrb[0].mxu0
        %1480 = vdwg.mxu0
        %1481 = vmatprep.subr.bf16.mxu0 %v1430
        %1482 = vmatpush1.bf16.msra.mxu0 %v1429
        %1483 = vmatprep.subr.bf16.mxu0 0
        %1484 = vmatpush1.bf16.msra.mxu0 0
        %1485 = vmatprep.subr.bf16.mxu0 0
        %1486 = vmatpush1.bf16.msra.mxu0 0
        %1487 = vmatprep.subr.bf16.mxu0 0
        %1488 = vmatpush1.bf16.msra.mxu0 0
        %1489 = vmatprep.subr.bf16.mxu0 0
        %1490 = vmatpush1.bf16.msra.mxu0 0
        %1491 = vmatprep.subr.bf16.mxu0 0
        %1492 = vmatpush1.bf16.msra.mxu0 0
        %1493 = vmatprep.subr.bf16.mxu0 0
        %1494 = vmatpush1.bf16.msra.mxu0 0
        %1495 = vmatprep.subr.bf16.mxu0 0
        %1496 = vmatpush1.bf16.msra.mxu0 0
        %1497 = vmatprep.subr.bf16.mxu0 0
        %1498 = vmatpush1.bf16.msra.mxu0 0
        %1499 = vmatprep.subr.bf16.mxu0 0
        %1500 = vmatpush1.bf16.msra.mxu0 0
        %1501 = vmatprep.subr.bf16.mxu0 0
        %1502 = vmatpush1.bf16.msra.mxu0 0
        %1503 = vmatprep.subr.bf16.mxu0 0
        %1504 = vmatpush1.bf16.msra.mxu0 0
        %1505 = vmatprep.subr.bf16.mxu0 0
        %1506 = vmatpush1.bf16.msra.mxu0 0
        %1507 = vmatprep.subr.bf16.mxu0 0
        %1508 = vmatpush1.bf16.msra.mxu0 0
        %1509 = vmatprep.subr.bf16.mxu0 0
        %1510 = vmatpush1.bf16.msra.mxu0 0
        %1511 = vmatprep.subr.bf16.mxu0 0
        %1512 = vmatpush1.bf16.msra.mxu0 0
        %1513 = vmatprep.mubr.bf16.mxu0 0
        %1514 = vmatmul.mubr.bf16.gmra.mrb[0].mxu0 %v1438
        %v1515 = vpop.f32.mrb[0].mxu0
        %v1516 = vadd.f32 %v1434, %v1515
        %v1517 = vpop.f32.mrb[0].mxu0
        %v1518 = vadd.f32 %v1434, %v1517
        %v1519 = vpop.f32.mrb[0].mxu0
        %v1520 = vpop.f32.mrb[0].mxu0
        %1521 = vdwg.mxu0
        %v1522 = vmul.f32 %v1475, 0.01
        %v1523 = vmul.f32 %v1477, 0.01
        %v1524 = vmul.f32 %v1516, 0.01
        %v1525 = vmul.f32 %v1518, 0.01
        %v1526 = vmax.f32 %v1475, %v1522
        %v1527 = vmax.f32 %v1477, %v1523
        %v1528 = vmax.f32 %v1516, %v1524
        %v1529 = vmax.f32 %v1518, %v1525
        %v1530 = vld [vmem:[%s7] sm:$0x3]
        %v1531 = vld [vmem:[%s8] sm:$0xf]
        %v1532 = vpack.c.bf16 %v1526, %v1526
        %v1533 = vpack.c.bf16 %v1527, %v1527
        %v1534 = vpack.c.bf16 %v1528, %v1528
        %v1535 = vpack.c.bf16 %v1529, %v1529
        %1537 = vset.pattern.permute.xlu0 0
        %1538 = vperm.xlu0 %1537, %v1531
        %v1539 = vpop.permute.xlu0 %1538
        %vm1541 = vcmask 64512
        %v1543 = vsel %vm1541, %v1530, 0
        %vm1545 = vcmask 1043456
        %v1547 = vsel %vm1545, %v1532, 0
        %v1550 = vsel %vm1545, %v1533, 0
        %v1553 = vsel %vm1545, %v1534, 0
        %v1556 = vsel %vm1545, %v1535, 0
        %1558 = vmatprep.subr.bf16.mxu0 %v1550
        %1559 = vmatpush1.bf16.msra.mxu0 %v1547
        %1560 = vmatprep.subr.bf16.mxu0 0
        %1561 = vmatpush1.bf16.msra.mxu0 0
        %1562 = vmatprep.subr.bf16.mxu0 0
        %1563 = vmatpush1.bf16.msra.mxu0 0
        %1564 = vmatprep.subr.bf16.mxu0 0
        %1565 = vmatpush1.bf16.msra.mxu0 0
        %1566 = vmatprep.subr.bf16.mxu0 0
        %1567 = vmatpush1.bf16.msra.mxu0 0
        %1568 = vmatprep.subr.bf16.mxu0 0
        %1569 = vmatpush1.bf16.msra.mxu0 0
        %1570 = vmatprep.subr.bf16.mxu0 0
        %1571 = vmatpush1.bf16.msra.mxu0 0
        %1572 = vmatprep.subr.bf16.mxu0 0
        %1573 = vmatpush1.bf16.msra.mxu0 0
        %1574 = vmatprep.subr.bf16.mxu0 0
        %1575 = vmatpush1.bf16.msra.mxu0 0
        %1576 = vmatprep.subr.bf16.mxu0 0
        %1577 = vmatpush1.bf16.msra.mxu0 0
        %1578 = vmatprep.subr.bf16.mxu0 0
        %1579 = vmatpush1.bf16.msra.mxu0 0
        %1580 = vmatprep.subr.bf16.mxu0 0
        %1581 = vmatpush1.bf16.msra.mxu0 0
        %1582 = vmatprep.subr.bf16.mxu0 0
        %1583 = vmatpush1.bf16.msra.mxu0 0
        %1584 = vmatprep.subr.bf16.mxu0 0
        %1585 = vmatpush1.bf16.msra.mxu0 0
        %1586 = vmatprep.subr.bf16.mxu0 0
        %1587 = vmatpush1.bf16.msra.mxu0 0
        %1588 = vmatprep.subr.bf16.mxu0 0
        %1589 = vmatpush1.bf16.msra.mxu0 0
        %1590 = vmatprep.mubr.bf16.mxu0 0
        %1591 = vmatmul.mubr.bf16.gmra.mrb[0].mxu0 %v1543
        %v1592 = vpop.f32.mrb[0].mxu0
        %v1593 = vadd.f32 %v1539, %v1592
        %v1594 = vpop.f32.mrb[0].mxu0
        %v1595 = vadd.f32 %v1539, %v1594
        %v1596 = vpop.f32.mrb[0].mxu0
        %v1597 = vpop.f32.mrb[0].mxu0
        %1598 = vdwg.mxu0
        %1599 = vmatprep.subr.bf16.mxu0 %v1556
        %1600 = vmatpush1.bf16.msra.mxu0 %v1553
        %1601 = vmatprep.subr.bf16.mxu0 0
        %1602 = vmatpush1.bf16.msra.mxu0 0
        %1603 = vmatprep.subr.bf16.mxu0 0
        %1604 = vmatpush1.bf16.msra.mxu0 0
        %1605 = vmatprep.subr.bf16.mxu0 0
        %1606 = vmatpush1.bf16.msra.mxu0 0
        %1607 = vmatprep.subr.bf16.mxu0 0
        %1608 = vmatpush1.bf16.msra.mxu0 0
        %1609 = vmatprep.subr.bf16.mxu0 0
        %1610 = vmatpush1.bf16.msra.mxu0 0
        %1611 = vmatprep.subr.bf16.mxu0 0
        %1612 = vmatpush1.bf16.msra.mxu0 0
        %1613 = vmatprep.subr.bf16.mxu0 0
        %1614 = vmatpush1.bf16.msra.mxu0 0
        %1615 = vmatprep.subr.bf16.mxu0 0
        %1616 = vmatpush1.bf16.msra.mxu0 0
        %1617 = vmatprep.subr.bf16.mxu0 0
        %1618 = vmatpush1.bf16.msra.mxu0 0
        %1619 = vmatprep.subr.bf16.mxu0 0
        %1620 = vmatpush1.bf16.msra.mxu0 0
        %1621 = vmatprep.subr.bf16.mxu0 0
        %1622 = vmatpush1.bf16.msra.mxu0 0
        %1623 = vmatprep.subr.bf16.mxu0 0
        %1624 = vmatpush1.bf16.msra.mxu0 0
        %1625 = vmatprep.subr.bf16.mxu0 0
        %1626 = vmatpush1.bf16.msra.mxu0 0
        %1627 = vmatprep.subr.bf16.mxu0 0
        %1628 = vmatpush1.bf16.msra.mxu0 0
        %1629 = vmatprep.subr.bf16.mxu0 0
        %1630 = vmatpush1.bf16.msra.mxu0 0
        %1631 = vmatprep.mubr.bf16.mxu0 0
        %1632 = vmatmul.mubr.bf16.gmra.mrb[0].mxu0 %v1543
        %v1633 = vpop.f32.mrb[0].mxu0
        %v1634 = vadd.f32 %v1539, %v1633
        %v1635 = vpop.f32.mrb[0].mxu0
        %v1636 = vadd.f32 %v1539, %v1635
        %v1637 = vpop.f32.mrb[0].mxu0
        %v1638 = vpop.f32.mrb[0].mxu0
        %1639 = vdwg.mxu0
        %v1640 = vsub.f32 0.0, %v1593
        %v1641 = vsub.f32 0.0, %v1595
        %v1642 = vsub.f32 0.0, %v1634
        %v1643 = vsub.f32 0.0, %v1636
        %v1644 = vmul.f32 %v1640, 1.442695
        %v1645 = vpow.pop %v1644
        %v1646 = vmul.f32 %v1641, 1.442695
        %v1647 = vpow.pop %v1646
        %v1648 = vmul.f32 %v1642, 1.442695
        %v1649 = vpow.pop %v1648
        %v1650 = vmul.f32 %v1643, 1.442695
        %v1651 = vpow.pop %v1650
        %v1652 = vadd.f32 %v1645, 1.0
        %v1653 = vadd.f32 %v1647, 1.0
        %v1654 = vadd.f32 %v1649, 1.0
        %v1655 = vadd.f32 %v1651, 1.0
        %v1656 = vrcp.pop %v1652
        %v1657 = vrcp.pop %v1653
        %v1658 = vrcp.pop %v1654
        %v1659 = vrcp.pop %v1655
        %v1664 = vcombine.low %v1656, %v1657
        %v1665 = vcombine.low %v1658, %v1659
        %1668 = vst [vmem:[%s326] sm:$0xff] %v1664
        %1669 = vst [vmem:[%s326 + $0x8] sm:$0xff] %v1665
        %s1670 = sand.u32 %s225, 1
        %s1671 = scalar_lea.sflag [#allocation3], %s1670
        %s1672 = sand.u32 %s225, 1
        %s1673 = smul.addr %s1672, 16
        %s1674 = scalar_lea.vmem [#allocation2], %s1673
        // Predicated region
        $region57: #{tpu_custom_call.1} parent=55 // pred_check
          %p1675 = pneg %p235
        $region58: #{tpu_custom_call.1} parent=55 // pred_check_branch
          %1677 = sbr.rel (%p1675) target = $region60
        $region59: #{tpu_custom_call.1} parent=55 // pred_region
          %s1678 = smul.u32 4, %s23
          %s1680 = ssub.s32 256, 256
          %1681 = vsyncadd %s1671, %s1680
          %s1682 = smul.addr %s1678, 64
          %s1683 = scalar_lea.hbm %s9, %s1682
          %s1685 = sshll.u32 %s1674, 4
          %s1686 = int_to_ptr.vmem [resolvable:$true] %s1685
          %1688 = dma.vmem_to_hbm [thread:$0]  %s1686, 256, %s1683, %s1671
        $region60: #{tpu_custom_call.1} parent=55 // pred_fallthru
          _
      $region56: #{tpu_custom_call.1} parent=5 // pred_fallthru
        _
      %p1689 = scmp.le.s32.totalorder 2, %s18
      // Predicated region
      $region61: #{tpu_custom_call.1} parent=5 // pred_check
        %p1690 = pneg %p1689
      $region62: #{tpu_custom_call.1} parent=5 // pred_check_branch
        %1692 = sbr.rel (%p1690) target = $region64
      $region63: #{tpu_custom_call.1} parent=5 // pred_region
        %s1693 = ssub.s32 %s18, 2
        // Predicated region
        $region65: #{tpu_custom_call.1} parent=63 // pred_check
          %p1694 = pneg %p241
        $region66: #{tpu_custom_call.1} parent=63 // pred_check_branch
          %1696 = sbr.rel (%p1694) target = $region68
        $region67: #{tpu_custom_call.1} parent=63 // pred_region
          %s1697 = sand.u32 %s226, 1
          %s1698 = scalar_lea.sflag [#allocation3], %s1697
          %s1699 = sand.u32 %s226, 1
          %s1700 = smul.addr %s1699, 16
          %s1701 = scalar_lea.vmem [#allocation2], %s1700
          %1702 = dma.done %s1698, 256
        $region68: #{tpu_custom_call.1} parent=63 // pred_fallthru
          _
      $region64: #{tpu_custom_call.1} parent=5 // pred_fallthru
        _
    $region6: #{tpu_custom_call.1} parent=1 // loop_footer
      %s22 = sadd.s32 1, %s18
    $region7: #{tpu_custom_call.1} parent=1 // loop_footer_branch
      %17 = sbr.rel target = $region3
    $region8: #{tpu_custom_call.1} parent=1 // loop_exit
      _
    %1703 = vsyncpa [#allocation3], 1
    %s1704 = scalar_lea.sflag [#allocation3], 1
    %1705 = vsyncpa %s1704, 1

</llo_original>
